<compile_context>
chip_gen: v6e
topology: v6e:2x2x1
jax: 0.10.0
libtpu: 0.0.40
codegen_flags: <defaults>
</compile_context>

<pallas_src>
import jax
import jax.numpy as jnp
from jax import lax
from jax.experimental import pallas as pl
from jax.experimental.pallas import tpu as pltpu


_BF16 = jnp.bfloat16
_VMEM_LIMIT = 32 * 1024 * 1024  # safe on v5e (128 MiB phys), v6e (128 MiB), v7x (64 MiB)


def _round_up(x, m):
    return ((x + m - 1) // m) * m


def _group_avg_matrix(c, num_groups):
    """(C, C) matrix averaging per-channel stats within each GroupNorm group."""
    cg = c // num_groups
    gidx = jnp.arange(c) // cg
    return (gidx[:, None] == gidx[None, :]).astype(jnp.float32) / float(cg)


# ----------------------------------------------------------------------------
# Pallas kernels
# ----------------------------------------------------------------------------

def _make_fused_conv_gn_kernel(row_offs, M, inv_count, eps, relu, has_skip, use_mask):
    """Fused per-sample conv (as shifted matmuls) + GroupNorm (+ReLU) (+skip add + ReLU)."""
    n_taps = len(row_offs)

    def kernel(*refs):
        it = iter(refs)
        x_ref = next(it)                                   # (1, Lin, K)        bf16
        w_ref = next(it)                                   # (n_taps, K, Cout)  bf16
        b_ref = next(it)                                   # (1, Cout)          f32
        gamma_ref = next(it)                               # (1, Cout)          f32
        beta_ref = next(it)                                # (1, Cout)          f32
        gmat_ref = next(it)                                # (Cout, Cout)       f32
        mask_ref = next(it) if use_mask else None          # (M, 1)             f32
        skip_ref = next(it) if has_skip else None          # (1, M, Cout)       bf16
        o_ref = next(it)                                   # (1, M, Cout)       bf16

        # ---- convolution: one MXU matmul per kernel tap, accumulated in f32 (no HBM im2col) ----
        off0 = row_offs[0]
        acc = jnp.dot(x_ref[0, off0:off0 + M, :], w_ref[0],
                      preferred_element_type=jnp.float32)
        for t in range(1, n_taps):
            off = row_offs[t]
            acc = acc + jnp.dot(x_ref[0, off:off + M, :], w_ref[t],
                                preferred_element_type=jnp.float32)

        # ---- GroupNorm on the f32 accumulator (bias folded into the per-channel offset) ----
        b = b_ref[...]
        if use_mask:
            mask = mask_ref[...]
            csum = jnp.sum(acc * mask, axis=0, keepdims=True)
        else:
            mask = None
            csum = jnp.sum(acc, axis=0, keepdims=True)
        cmean = csum * inv_count + b                       # per-channel mean of conv+bias
        gmean = jnp.dot(cmean, gmat_ref[...], preferred_element_type=jnp.float32)
        coff = gmean - b                                   # (x - group_mean) == (acc - coff)
        d = acc - coff                                     # centered values (no E[x^2]-E[x]^2)
        if use_mask:
            d = d * mask
        vsum = jnp.sum(d * d, axis=0, keepdims=True)
        gvar = jnp.dot(vsum, gmat_ref[...], preferred_element_type=jnp.float32) * inv_count
        inv = lax.rsqrt(gvar + eps)
        scale = gamma_ref[...] * inv                       # folded per-channel scale
        shift = beta_ref[...] - coff * scale               # folded per-channel shift
        y = acc * scale + shift                            # single mul+add pass over the big tile
        if relu:
            y = jnp.maximum(y, 0.0)
        if has_skip:                                       # torch: relu(x + relu(gn2(conv2)))
            y = jnp.maximum(y + skip_ref[0].astype(jnp.float32), 0.0)
        o_ref[0] = y.astype(o_ref.dtype)

    return kernel


def _mm_bias_kernel(a_ref, w_ref, b_ref, o_ref):
    """(TM, K) @ (K, Cout) + bias (bf16 operands, f32 accumulation)."""
    acc = jnp.dot(a_ref[...], w_ref[...], preferred_element_type=jnp.float32)
    o_ref[...] = (acc + b_ref[...]).astype(o_ref.dtype)


# ----------------------------------------------------------------------------
# Pallas wrappers
# ----------------------------------------------------------------------------

def conv_gn(x, w, b, gamma, beta, num_groups, *, stride=1, padding=1,
            relu=True, skip=None, eps=1e-5):
    """Fused Conv2d + GroupNorm (+ReLU) (+residual add + ReLU).

    x: (N, H, W, Cin) NHWC.  w: (KH, KW, Cin, Cout).  Returns (N, Ho, Wo, Cout) bf16.
    3x3 / stride-1 convs use the direct in-kernel formulation (9 shifted matmuls on a flattened
    width-padded layout); the 7x7 stem / stride-2 / 1x1-downsample convs use a small wrapper-side
    im2col (only at the strided, low-resolution stages).
    """
    N, H, W, Cin = x.shape
    KH, KW, _, Cout = w.shape
    Ho = (H + 2 * padding - KH) // stride + 1
    Wo = (W + 2 * padding - KW) // stride + 1
    x = x.astype(_BF16)
    w = w.astype(_BF16)

    direct = (KH == 3 and KW == 3 and stride == 1 and padding == 1)
    if direct:
        Wp = Wo + 2                       # padded row width (1 left + 1 right zero column)
        M = Ho * Wp                       # rows of the flattened output (2 junk cols per row)
        count = Ho * Wo                   # valid output positions per sample (for GN stats)
        xp = jnp.pad(x, ((0, 0), (1, 1), (1, 1), (0, 0)))               # (N, Ho+2, Wp, Cin)
        xf = xp.reshape(N, (Ho + 2) * Wp, Cin)
        xf = jnp.pad(xf, ((0, 0), (0, 2), (0, 0)))                      # spare rows for last taps
        wk = w.reshape(9, Cin, Cout)
        row_offs = tuple(kh * Wp + kw for kh in range(3) for kw in range(3))
        valid = (jnp.arange(M) % Wp) < Wo
        mask = valid.astype(jnp.float32).reshape(M, 1)
        use_mask = True
    else:
        # TODO(synk): stride-2 / 7x7 convs keep a wrapper-side im2col (small, strided stages only).
        xp = jnp.pad(x, ((0, 0), (padding, padding), (padding, padding), (0, 0)))
        cols = []
        for kh in range(KH):
            for kw in range(KW):
                cols.append(xp[:, kh:kh + (Ho - 1) * stride + 1:stride,
                                  kw:kw + (Wo - 1) * stride + 1:stride, :])
        patches = jnp.concatenate(cols, axis=-1)                        # (N, Ho, Wo, KH*KW*Cin)
        K = KH * KW * Cin
        Kp = _round_up(K, 16)             # sublane-friendly K (stem: 147 -> 160)
        M = Ho * Wo
        count = M
        xf = patches.reshape(N, M, K)
        wk = w.reshape(1, K, Cout)
        if Kp != K:
            xf = jnp.pad(xf, ((0, 0), (0, 0), (0, Kp - K)))
            wk = jnp.pad(wk, ((0, 0), (0, Kp - K), (0, 0)))
        row_offs = (0,)
        mask = None
        use_mask = False

    gmat = _group_avg_matrix(Cout, num_groups)
    has_skip = skip is not None

    inputs = [xf, wk,
              b.reshape(1, Cout).astype(jnp.float32),
              gamma.reshape(1, Cout).astype(jnp.float32),
              beta.reshape(1, Cout).astype(jnp.float32),
              gmat]
    Lin, Kd = xf.shape[1], xf.shape[2]
    T = wk.shape[0]
    in_specs = [
        pl.BlockSpec((1, Lin, Kd), lambda n: (n, 0, 0)),
        pl.BlockSpec((T, Kd, Cout), lambda n: (0, 0, 0)),
        pl.BlockSpec((1, Cout), lambda n: (0, 0)),
        pl.BlockSpec((1, Cout), lambda n: (0, 0)),
        pl.BlockSpec((1, Cout), lambda n: (0, 0)),
        pl.BlockSpec((Cout, Cout), lambda n: (0, 0)),
    ]
    if use_mask:
        inputs.append(mask)
        in_specs.append(pl.BlockSpec((M, 1), lambda n: (0, 0)))
    if has_skip:
        if direct:
            skip_f = jnp.pad(skip.astype(_BF16),
                             ((0, 0), (0, 0), (0, 2), (0, 0))).reshape(N, M, Cout)
        else:
            skip_f = skip.astype(_BF16).reshape(N, M, Cout)
        inputs.append(skip_f)
        in_specs.append(pl.BlockSpec((1, M, Cout), lambda n: (n, 0, 0)))

    # TODO(synk): for large images, tile over H with a two-pass (stats-then-apply) GroupNorm
    #             instead of one whole-sample block, to stay within v7x/v5e scoped VMEM.
    kernel = _make_fused_conv_gn_kernel(row_offs, M, 1.0 / count, eps, relu,
                                        has_skip, use_mask)
    out = pl.pallas_call(
        kernel,
        out_shape=jax.ShapeDtypeStruct((N, M, Cout), _BF16),
        grid=(N,),
        in_specs=in_specs,
        out_specs=pl.BlockSpec((1, M, Cout), lambda n: (n, 0, 0)),
        compiler_params=pltpu.CompilerParams(
            dimension_semantics=("parallel",),
            vmem_limit_bytes=_VMEM_LIMIT),
    )(*inputs)

    if direct:
        # drop the 2 junk columns per row introduced by the padded-width layout
        out = out.reshape(N, Ho, Wp, Cout)[:, :, :Wo, :]
    else:
        out = out.reshape(N, Ho, Wo, Cout)
    return out


def conv1x1(x, w, b, out_dtype=jnp.float32):
    """Pointwise conv (no norm / activation) as a row-tiled matmul, bf16 operands."""
    N, H, W, Cin = x.shape
    w2 = w.reshape(Cin, -1).astype(_BF16)
    Cout = w2.shape[1]
    M = N * H * W
    a = x.reshape(M, Cin).astype(_BF16)
    # Clamp the row tile to the real problem size (deep stages have M = 8..128).
    TM = min(256, _round_up(M, 8))
    Mp = _round_up(M, TM)
    if Mp != M:
        a = jnp.pad(a, ((0, Mp - M), (0, 0)))
    out = pl.pallas_call(
        _mm_bias_kernel,
        out_shape=jax.ShapeDtypeStruct((Mp, Cout), out_dtype),
        grid=(Mp // TM,),
        in_specs=[pl.BlockSpec((TM, Cin), lambda i: (i, 0)),
                  pl.BlockSpec((Cin, Cout), lambda i: (0, 0)),
                  pl.BlockSpec((1, Cout), lambda i: (0, 0))],
        out_specs=pl.BlockSpec((TM, Cout), lambda i: (i, 0)),
        compiler_params=pltpu.CompilerParams(
            dimension_semantics=("parallel",),
            vmem_limit_bytes=_VMEM_LIMIT),
    )(a, w2, b.reshape(1, Cout).astype(jnp.float32))
    return out[:M].reshape(N, H, W, Cout)


def resize_bilinear(x, out_hw):
    # torchvision TF.resize default = bilinear, half-pixel centers; antialias is a no-op for
    # upsampling, so jax.image.resize('bilinear') matches.
    # TODO(synk): resize kept as JAX glue (stencil, not a matmul/reduction hot path).
    N, _, _, C = x.shape
    return jax.image.resize(x.astype(jnp.float32), (N, out_hw[0], out_hw[1], C),
                            method="bilinear")


# ----------------------------------------------------------------------------
# Model (parameters + forward)
# ----------------------------------------------------------------------------

def _make_conv(key, kh, kw, cin, cout):
    # kaiming_normal_(mode='fan_out', nonlinearity='relu'): std = sqrt(2 / (cout*kh*kw))
    std = (2.0 / (cout * kh * kw)) ** 0.5
    w = (jax.random.normal(key, (kh, kw, cin, cout), jnp.float32) * std).astype(_BF16)
    b = jnp.zeros((cout,), jnp.float32)
    return w, b


def _make_resblock(key, cin, cout, stride):
    ks = jax.random.split(key, 3)
    p = {"stride": stride, "ng": cout // 8}
    p["conv1_w"], p["conv1_b"] = _make_conv(ks[0], 3, 3, cin, cout)
    p["conv2_w"], p["conv2_b"] = _make_conv(ks[1], 3, 3, cout, cout)
    p["gn1_g"], p["gn1_b"] = jnp.ones((cout,)), jnp.zeros((cout,))
    p["gn2_g"], p["gn2_b"] = jnp.ones((cout,)), jnp.zeros((cout,))
    if stride != 1:
        p["down_w"], p["down_b"] = _make_conv(ks[2], 1, 1, cin, cout)
        p["gn3_g"], p["gn3_b"] = jnp.ones((cout,)), jnp.zeros((cout,))
    return p


def _make_layer(key, cin, cout, stride):
    k1, k2 = jax.random.split(key)
    return [_make_resblock(k1, cin, cout, stride), _make_resblock(k2, cout, cout, 1)]


def make_encoder_params(key):
    ks = jax.random.split(key, 10)
    P = {}
    P["conv1_w"], P["conv1_b"] = _make_conv(ks[0], 7, 7, 3, 64)
    P["norm1_g"], P["norm1_b"] = jnp.ones((64,)), jnp.zeros((64,))
    P["layer1"] = _make_layer(ks[1], 64, 64, 1)
    P["layer2"] = _make_layer(ks[2], 64, 96, 2)
    P["layer3"] = _make_layer(ks[3], 96, 128, 2)
    P["layer4"] = _make_layer(ks[4], 128, 160, 2)
    P["conv2_w"], P["conv2_b"] = _make_conv(ks[5], 1, 1, 160, 160)
    P["up_layer2"] = _make_layer(ks[6], 160 + 128, 128, 1)
    P["after2_w"], P["after2_b"] = _make_conv(ks[7], 1, 1, 128, 128)
    P["up_layer1"] = _make_layer(ks[8], 128 + 96, 96, 1)
    P["after1_w"], P["after1_b"] = _make_conv(ks[9], 1, 1, 96, 96)
    return P


def residual_block(x, p):
    stride = p["stride"]
    ng = p["ng"]
    cout = p["conv1_w"].shape[-1]

    # conv1 + GN1 + ReLU  (fused; direct 3x3 path when stride==1, im2col path when stride==2)
    y = conv_gn(x, p["conv1_w"], p["conv1_b"], p["gn1_g"], p["gn1_b"], ng,
                stride=stride, padding=1, relu=True)

    if stride != 1:
        # downsample branch: 1x1 stride-s conv + GroupNorm (no ReLU), fused
        xs = x[:, ::stride, ::stride, :]
        skip = conv_gn(xs, p["down_w"], p["down_b"], p["gn3_g"], p["gn3_b"], ng,
                       stride=1, padding=0, relu=False)
    elif x.shape[-1] == cout:
        skip = x
    else:
        # torch: `if x.shape[1] != y.shape[1]: return y`  -> skip connection dropped
        skip = None

    # conv2 + GN2 + ReLU (+ residual add + ReLU), all fused in one kernel
    return conv_gn(y, p["conv2_w"], p["conv2_b"], p["gn2_g"], p["gn2_b"], ng,
                   stride=1, padding=1, relu=True, skip=skip)


def run_layer(x, blocks):
    for bp in blocks:
        x = residual_block(x, bp)
    return x


def feature_encoder_ccmr(P, x):
    """x: (N, H, W, 3) NHWC.  norm_fn='group', four_scales=False, y=None, single-array input."""
    x = conv_gn(x, P["conv1_w"], P["conv1_b"], P["norm1_g"], P["norm1_b"], 8,
                stride=2, padding=3, relu=True)            # 7x7 stem + GN + ReLU (fused)
    enc_out1 = x = run_layer(x, P["layer1"])
    enc_out2 = x = run_layer(x, P["layer2"])
    enc_out3 = x = run_layer(x, P["layer3"])
    x = run_layer(x, P["layer4"])
    enc_out4 = x = conv1x1(x, P["conv2_w"], P["conv2_b"])

    x = resize_bilinear(x, enc_out3.shape[1:3]).astype(_BF16)
    x = jnp.concatenate([x, enc_out3], axis=-1)            # matches torch.cat((x, enc_out3), 1)
    x = run_layer(x, P["up_layer2"])
    up2_out = x = conv1x1(x, P["after2_w"], P["after2_b"])

    x = resize_bilinear(x, enc_out2.shape[1:3]).astype(_BF16)
    x = jnp.concatenate([x, enc_out2], axis=-1)
    x = run_layer(x, P["up_layer1"])
    up1_out = x = conv1x1(x, P["after1_w"], P["after1_b"])

    return [enc_out4, up2_out, up1_out]


# ----------------------------------------------------------------------------
# Test
# ----------------------------------------------------------------------------

if __name__ == "__main__":
    key = jax.random.PRNGKey(0)
    pkey, xkey = jax.random.split(key)
    params = make_encoder_params(pkey)

    # PyTorch-style NCHW input; small shape (N=2, C=3, H=W=32; H,W divisible by 16).
    x_nchw = jax.random.normal(xkey, (2, 3, 32, 32), jnp.float32)
    x = jnp.transpose(x_nchw, (0, 2, 3, 1))                # -> NHWC

    outs = feature_encoder_ccmr(params, x)
    for o in outs:
        jax.block_until_ready(o)

    assert outs[0].shape == (2, 2, 2, 160), outs[0].shape  # enc_out4  (1/16 res)
    assert outs[1].shape == (2, 4, 4, 128), outs[1].shape  # up2_out   (1/8  res)
    assert outs[2].shape == (2, 8, 8, 96), outs[2].shape   # up1_out   (1/4  res)
    assert all(bool(jnp.all(jnp.isfinite(o.astype(jnp.float32)))) for o in outs)

    print("KERNEL_OK")
</pallas_src>

<mosaic_0001>
module attributes {stable_mosaic.version = 11 : i64} {
  func.func @kernel(%arg0: i32, %arg1: memref<1x256x160xbf16, #tpu.memory_space<vmem>>, %arg2: memref<1x160x64xbf16, #tpu.memory_space<vmem>>, %arg3: memref<1x64xf32, #tpu.memory_space<vmem>>, %arg4: memref<1x64xf32, #tpu.memory_space<vmem>>, %arg5: memref<1x64xf32, #tpu.memory_space<vmem>>, %arg6: memref<64x64xf32, #tpu.memory_space<vmem>>, %arg7: memref<1x256x64xbf16, #tpu.memory_space<vmem>>) attributes {dimension_semantics = [#tpu.dimension_semantics<parallel>], iteration_bounds = array<i64: 2>, scalar_prefetch = 0 : i64, scratch_operands = 0 : i64, tpu.core_type = #tpu.core_type<tc>, window_params = [{transform_indices = @transform_0, window_bounds = array<i64: 1, 256, 160>}, {pipeline_mode = #tpu.pipeline_mode<synchronous>, transform_indices = @transform_1, window_bounds = array<i64: 1, 160, 64>}, {pipeline_mode = #tpu.pipeline_mode<synchronous>, transform_indices = @transform_2, window_bounds = array<i64: 1, 64>}, {pipeline_mode = #tpu.pipeline_mode<synchronous>, transform_indices = @transform_3, window_bounds = array<i64: 1, 64>}, {pipeline_mode = #tpu.pipeline_mode<synchronous>, transform_indices = @transform_4, window_bounds = array<i64: 1, 64>}, {pipeline_mode = #tpu.pipeline_mode<synchronous>, transform_indices = @transform_5, window_bounds = array<i64: 64, 64>}, {transform_indices = @transform_6, window_bounds = array<i64: 1, 256, 64>}]} {
    %c0 = arith.constant 0 : index
    %c0_0 = arith.constant 0 : index
    %c0_1 = arith.constant 0 : index
    %0 = vector.load %arg1[%c0, %c0_0, %c0_1] : memref<1x256x160xbf16, #tpu.memory_space<vmem>>, vector<1x256x160xbf16>
    %1 = vector.shape_cast %0 : vector<1x256x160xbf16> to vector<256x160xbf16>
    %c0_2 = arith.constant 0 : index
    %c0_3 = arith.constant 0 : index
    %c0_4 = arith.constant 0 : index
    %2 = vector.load %arg2[%c0_2, %c0_3, %c0_4] : memref<1x160x64xbf16, #tpu.memory_space<vmem>>, vector<1x160x64xbf16>
    %3 = vector.shape_cast %2 : vector<1x160x64xbf16> to vector<160x64xbf16>
    %cst = arith.constant dense<0.000000e+00> : vector<256x64xf32>
    %4 = tpu.matmul %1, %3, %cst {dimension_numbers = #tpu.dot_dimension_numbers<[1], [0], [0], [1], [0, 0, 1, 1], [], []>} : vector<256x160xbf16>, vector<160x64xbf16>, vector<256x64xf32> -> vector<256x64xf32>
    %c0_5 = arith.constant 0 : index
    %c0_6 = arith.constant 0 : index
    %5 = vector.load %arg3[%c0_5, %c0_6] : memref<1x64xf32, #tpu.memory_space<vmem>>, vector<1x64xf32>
    %cst_7 = arith.constant dense<0.000000e+00> : vector<64xf32>
    %6 = vector.multi_reduction <add>, %4, %cst_7 [0] : vector<256x64xf32> to vector<64xf32>
    %7 = vector.shape_cast %6 : vector<64xf32> to vector<1x64xf32>
    %cst_8 = arith.constant 3.906250e-03 : f32
    %8 = vector.broadcast %cst_8 : f32 to vector<1x64xf32>
    %9 = arith.mulf %7, %8 : vector<1x64xf32>
    %10 = arith.addf %9, %5 : vector<1x64xf32>
    %c0_9 = arith.constant 0 : index
    %c0_10 = arith.constant 0 : index
    %11 = vector.load %arg6[%c0_9, %c0_10] : memref<64x64xf32, #tpu.memory_space<vmem>>, vector<64x64xf32>
    %cst_11 = arith.constant dense<0.000000e+00> : vector<1x64xf32>
    %12 = tpu.matmul %10, %11, %cst_11 {dimension_numbers = #tpu.dot_dimension_numbers<[1], [0], [0], [1], [0, 0, 1, 1], [], []>} : vector<1x64xf32>, vector<64x64xf32>, vector<1x64xf32> -> vector<1x64xf32>
    %13 = arith.subf %12, %5 : vector<1x64xf32>
    %14 = vector.broadcast %13 : vector<1x64xf32> to vector<256x64xf32>
    %15 = arith.subf %4, %14 : vector<256x64xf32>
    %16 = arith.mulf %15, %15 : vector<256x64xf32>
    %cst_12 = arith.constant dense<0.000000e+00> : vector<64xf32>
    %17 = vector.multi_reduction <add>, %16, %cst_12 [0] : vector<256x64xf32> to vector<64xf32>
    %18 = vector.shape_cast %17 : vector<64xf32> to vector<1x64xf32>
    %c0_13 = arith.constant 0 : index
    %c0_14 = arith.constant 0 : index
    %19 = vector.load %arg6[%c0_13, %c0_14] : memref<64x64xf32, #tpu.memory_space<vmem>>, vector<64x64xf32>
    %cst_15 = arith.constant dense<0.000000e+00> : vector<1x64xf32>
    %20 = tpu.matmul %18, %19, %cst_15 {dimension_numbers = #tpu.dot_dimension_numbers<[1], [0], [0], [1], [0, 0, 1, 1], [], []>} : vector<1x64xf32>, vector<64x64xf32>, vector<1x64xf32> -> vector<1x64xf32>
    %cst_16 = arith.constant 3.906250e-03 : f32
    %21 = vector.broadcast %cst_16 : f32 to vector<1x64xf32>
    %22 = arith.mulf %20, %21 : vector<1x64xf32>
    %cst_17 = arith.constant 9.99999974E-6 : f32
    %23 = vector.broadcast %cst_17 : f32 to vector<1x64xf32>
    %24 = arith.addf %22, %23 : vector<1x64xf32>
    %25 = math.rsqrt %24 : vector<1x64xf32>
    %c0_18 = arith.constant 0 : index
    %c0_19 = arith.constant 0 : index
    %26 = vector.load %arg4[%c0_18, %c0_19] : memref<1x64xf32, #tpu.memory_space<vmem>>, vector<1x64xf32>
    %27 = arith.mulf %26, %25 : vector<1x64xf32>
    %c0_20 = arith.constant 0 : index
    %c0_21 = arith.constant 0 : index
    %28 = vector.load %arg5[%c0_20, %c0_21] : memref<1x64xf32, #tpu.memory_space<vmem>>, vector<1x64xf32>
    %29 = arith.mulf %13, %27 : vector<1x64xf32>
    %30 = arith.subf %28, %29 : vector<1x64xf32>
    %31 = vector.broadcast %27 : vector<1x64xf32> to vector<256x64xf32>
    %32 = arith.mulf %4, %31 : vector<256x64xf32>
    %33 = vector.broadcast %30 : vector<1x64xf32> to vector<256x64xf32>
    %34 = arith.addf %32, %33 : vector<256x64xf32>
    %cst_22 = arith.constant 0.000000e+00 : f32
    %35 = vector.broadcast %cst_22 : f32 to vector<256x64xf32>
    %36 = arith.maximumf %34, %35 : vector<256x64xf32>
    %37 = arith.truncf %36 : vector<256x64xf32> to vector<256x64xbf16>
    %c0_23 = arith.constant 0 : index
    %c0_24 = arith.constant 0 : index
    %c0_25 = arith.constant 0 : index
    %38 = vector.load %arg7[%c0_23, %c0_24, %c0_25] : memref<1x256x64xbf16, #tpu.memory_space<vmem>>, vector<1x256x64xbf16>
    %39 = vector.shape_cast %38 : vector<1x256x64xbf16> to vector<256x64xbf16>
    %40 = vector.shape_cast %37 : vector<256x64xbf16> to vector<1x256x64xbf16>
    tpu.vector_store %arg7[%c0_23, %c0_24, %c0_25], %40 {strides = array<i32>} : memref<1x256x64xbf16, #tpu.memory_space<vmem>>, vector<1x256x64xbf16>,
    return
  }
  func.func @transform_0(%arg0: i32) -> (i32, i32, i32) {
    %c0_i32 = arith.constant 0 : i32
    %c0_i32_0 = arith.constant 0 : i32
    %c0_i32_1 = arith.constant 0 : i32
    return %arg0, %c0_i32, %c0_i32_0 : i32, i32, i32
  }
  func.func @transform_1(%arg0: i32) -> (i32, i32, i32) {
    %c0_i32 = arith.constant 0 : i32
    %c0_i32_0 = arith.constant 0 : i32
    %c0_i32_1 = arith.constant 0 : i32
    %c0_i32_2 = arith.constant 0 : i32
    return %c0_i32, %c0_i32_0, %c0_i32_1 : i32, i32, i32
  }
  func.func @transform_2(%arg0: i32) -> (i32, i32) {
    %c0_i32 = arith.constant 0 : i32
    %c0_i32_0 = arith.constant 0 : i32
    %c0_i32_1 = arith.constant 0 : i32
    return %c0_i32, %c0_i32_0 : i32, i32
  }
  func.func @transform_3(%arg0: i32) -> (i32, i32) {
    %c0_i32 = arith.constant 0 : i32
    %c0_i32_0 = arith.constant 0 : i32
    %c0_i32_1 = arith.constant 0 : i32
    return %c0_i32, %c0_i32_0 : i32, i32
  }
  func.func @transform_4(%arg0: i32) -> (i32, i32) {
    %c0_i32 = arith.constant 0 : i32
    %c0_i32_0 = arith.constant 0 : i32
    %c0_i32_1 = arith.constant 0 : i32
    return %c0_i32, %c0_i32_0 : i32, i32
  }
  func.func @transform_5(%arg0: i32) -> (i32, i32) {
    %c0_i32 = arith.constant 0 : i32
    %c0_i32_0 = arith.constant 0 : i32
    %c0_i32_1 = arith.constant 0 : i32
    return %c0_i32, %c0_i32_0 : i32, i32
  }
  func.func @transform_6(%arg0: i32) -> (i32, i32, i32) {
    %c0_i32 = arith.constant 0 : i32
    %c0_i32_0 = arith.constant 0 : i32
    %c0_i32_1 = arith.constant 0 : i32
    return %arg0, %c0_i32, %c0_i32_0 : i32, i32, i32
  }
}

</mosaic_0001>

<llo_original>
// kernel: tpu_custom_call.1
$region0: #{tpu_custom_call.1}
  #allocation0 [shape = 'u32[]', space=smem, size = 0x4, offset = 0x4, fixed_abs, tag = 'smem constant byte address 0x4 - core index']
  #allocation1 [shape = 'u32[144,128]{1,0:T(1,128)}', space=vmem, size = 0x12000, scoped, tag = 'internal scratch']
  %s0 = inlined_call_operand.vmem [shape: bf16[2,256,160], index: 0, kind: input, shape index: {}]
  %s1 = inlined_call_operand.vmem [shape: bf16[1,160,64], index: 1, kind: input, shape index: {}]
  %s2 = inlined_call_operand.vmem [shape: f32[1,64], index: 2, kind: input, shape index: {}]
  %s3 = inlined_call_operand.vmem [shape: f32[1,64], index: 3, kind: input, shape index: {}]
  %s4 = inlined_call_operand.vmem [shape: f32[1,64], index: 4, kind: input, shape index: {}]
  %s5 = inlined_call_operand.vmem [shape: f32[64,64], index: 5, kind: input, shape index: {}]
  %s6 = inlined_call_operand.vmem [shape: bf16[2,256,64], index: 6, kind: output, shape index: {}]
  %s7 = sld [smem:[#allocation0]]
  $region57: #{tpu_custom_call.1} parent=0
    _
  %s9 = ssub.s32 1, %s7
  %s10 = scalar_select 0, %s9, %s7
  loop: start=0, step=1, limit=4
  $region2: #{tpu_custom_call.1} parent=0 // loop_pre_header
    _
  $region3: #{tpu_custom_call.1} parent=0 // loop_header
    %s12 = sphi 0, %s16
    %p13 = scmp.ge.s32.totalorder %s12, 4
    %s22 = sphi 0, %s24
    %s25 = sphi 0, %s22
    %s26 = sphi 0, %s25
    %s42 = sphi 0, %s26
    %s46 = sphi 0, %s46
    %s48 = sphi 0, %s46
    %s49 = sphi 0, %s48
    %s63 = sphi 0, %s49
    %s67 = sphi 0, %s67
    %s69 = sphi 0, %s67
    %s70 = sphi 0, %s69
    %s84 = sphi 0, %s70
    %s88 = sphi 0, %s88
    %s90 = sphi 0, %s88
    %s91 = sphi 0, %s90
    %s105 = sphi 0, %s91
    %s109 = sphi 0, %s109
    %s111 = sphi 0, %s109
    %s112 = sphi 0, %s111
    %s126 = sphi 0, %s112
    %s130 = sphi 0, %s130
    %s132 = sphi 0, %s130
    %s133 = sphi 0, %s132
    %s147 = sphi 0, %s133
    %s153 = sphi 0, %s155
    %s156 = sphi 0, %s153
    %s157 = sphi 0, %s156
    %s173 = sphi 0, %s157
  $region4: #{tpu_custom_call.1} parent=0 // loop_header_branch
    %15 = sbr.rel (%p13) target = $region8
  $region5: #{tpu_custom_call.1} parent=0 // loop_body
    %s17 = ssub.s32 %s12, 1
    %s18 = ssub.s32 %s12, 2
    %s19 = sadd.s32 %s12, 1
    %s20 = ssub.s32 %s12, %s19
    %p21 = scmp.eq.s32.totalorder %s20, 0
    %s23 = sadd.s32 %s22, 1
    %s24 = scalar_select %p21, %s22, %s23
    %p27 = pneg %p21
    %p28 = scmp.eq.s32.totalorder %s12, 1
    %p29 = por %p27, %p28
    %p30 = scmp.ne.s32.totalorder %s22, %s25
    %p31 = scmp.eq.s32.totalorder %s12, 0
    %p32 = por %p30, %p31
    %p33 = scmp.ne.s32.totalorder %s22, %s25
    %p34 = scmp.eq.s32.totalorder %s17, 1
    %p35 = por %p33, %p34
    %p36 = scmp.ne.s32.totalorder %s25, %s26
    %p37 = scmp.eq.s32.totalorder %s17, 0
    %p38 = por %p36, %p37
    %p39 = scmp.ne.s32.totalorder %s25, %s26
    %p40 = scmp.eq.s32.totalorder %s18, 1
    %p41 = por %p39, %p40
    %p43 = scmp.ne.s32.totalorder %s26, %s42
    %p44 = scmp.eq.s32.totalorder %s18, 0
    %p45 = por %p43, %p44
    %s47 = sadd.s32 %s46, 1
    %p50 = scmp.eq.s32.totalorder %s12, 1
    %p51 = scmp.ne.s32.totalorder %s46, %s48
    %p52 = scmp.eq.s32.totalorder %s12, 0
    %p53 = por %p51, %p52
    %p54 = scmp.ne.s32.totalorder %s46, %s48
    %p55 = scmp.eq.s32.totalorder %s17, 1
    %p56 = por %p54, %p55
    %p57 = scmp.ne.s32.totalorder %s48, %s49
    %p58 = scmp.eq.s32.totalorder %s17, 0
    %p59 = por %p57, %p58
    %p60 = scmp.ne.s32.totalorder %s48, %s49
    %p61 = scmp.eq.s32.totalorder %s18, 1
    %p62 = por %p60, %p61
    %p64 = scmp.ne.s32.totalorder %s49, %s63
    %p65 = scmp.eq.s32.totalorder %s18, 0
    %p66 = por %p64, %p65
    %s68 = sadd.s32 %s67, 1
    %p71 = scmp.eq.s32.totalorder %s12, 1
    %p72 = scmp.ne.s32.totalorder %s67, %s69
    %p73 = scmp.eq.s32.totalorder %s12, 0
    %p74 = por %p72, %p73
    %p75 = scmp.ne.s32.totalorder %s67, %s69
    %p76 = scmp.eq.s32.totalorder %s17, 1
    %p77 = por %p75, %p76
    %p78 = scmp.ne.s32.totalorder %s69, %s70
    %p79 = scmp.eq.s32.totalorder %s17, 0
    %p80 = por %p78, %p79
    %p81 = scmp.ne.s32.totalorder %s69, %s70
    %p82 = scmp.eq.s32.totalorder %s18, 1
    %p83 = por %p81, %p82
    %p85 = scmp.ne.s32.totalorder %s70, %s84
    %p86 = scmp.eq.s32.totalorder %s18, 0
    %p87 = por %p85, %p86
    %s89 = sadd.s32 %s88, 1
    %p92 = scmp.eq.s32.totalorder %s12, 1
    %p93 = scmp.ne.s32.totalorder %s88, %s90
    %p94 = scmp.eq.s32.totalorder %s12, 0
    %p95 = por %p93, %p94
    %p96 = scmp.ne.s32.totalorder %s88, %s90
    %p97 = scmp.eq.s32.totalorder %s17, 1
    %p98 = por %p96, %p97
    %p99 = scmp.ne.s32.totalorder %s90, %s91
    %p100 = scmp.eq.s32.totalorder %s17, 0
    %p101 = por %p99, %p100
    %p102 = scmp.ne.s32.totalorder %s90, %s91
    %p103 = scmp.eq.s32.totalorder %s18, 1
    %p104 = por %p102, %p103
    %p106 = scmp.ne.s32.totalorder %s91, %s105
    %p107 = scmp.eq.s32.totalorder %s18, 0
    %p108 = por %p106, %p107
    %s110 = sadd.s32 %s109, 1
    %p113 = scmp.eq.s32.totalorder %s12, 1
    %p114 = scmp.ne.s32.totalorder %s109, %s111
    %p115 = scmp.eq.s32.totalorder %s12, 0
    %p116 = por %p114, %p115
    %p117 = scmp.ne.s32.totalorder %s109, %s111
    %p118 = scmp.eq.s32.totalorder %s17, 1
    %p119 = por %p117, %p118
    %p120 = scmp.ne.s32.totalorder %s111, %s112
    %p121 = scmp.eq.s32.totalorder %s17, 0
    %p122 = por %p120, %p121
    %p123 = scmp.ne.s32.totalorder %s111, %s112
    %p124 = scmp.eq.s32.totalorder %s18, 1
    %p125 = por %p123, %p124
    %p127 = scmp.ne.s32.totalorder %s112, %s126
    %p128 = scmp.eq.s32.totalorder %s18, 0
    %p129 = por %p127, %p128
    %s131 = sadd.s32 %s130, 1
    %p134 = scmp.eq.s32.totalorder %s12, 1
    %p135 = scmp.ne.s32.totalorder %s130, %s132
    %p136 = scmp.eq.s32.totalorder %s12, 0
    %p137 = por %p135, %p136
    %p138 = scmp.ne.s32.totalorder %s130, %s132
    %p139 = scmp.eq.s32.totalorder %s17, 1
    %p140 = por %p138, %p139
    %p141 = scmp.ne.s32.totalorder %s132, %s133
    %p142 = scmp.eq.s32.totalorder %s17, 0
    %p143 = por %p141, %p142
    %p144 = scmp.ne.s32.totalorder %s132, %s133
    %p145 = scmp.eq.s32.totalorder %s18, 1
    %p146 = por %p144, %p145
    %p148 = scmp.ne.s32.totalorder %s133, %s147
    %p149 = scmp.eq.s32.totalorder %s18, 0
    %p150 = por %p148, %p149
    %s151 = ssub.s32 %s12, %s19
    %p152 = scmp.eq.s32.totalorder %s151, 0
    %s154 = sadd.s32 %s153, 1
    %s155 = scalar_select %p152, %s153, %s154
    %p158 = pneg %p152
    %p159 = scmp.eq.s32.totalorder %s12, 1
    %p160 = por %p158, %p159
    %p161 = scmp.ne.s32.totalorder %s153, %s156
    %p162 = scmp.eq.s32.totalorder %s12, 0
    %p163 = por %p161, %p162
    %p164 = scmp.ne.s32.totalorder %s153, %s156
    %p165 = scmp.eq.s32.totalorder %s17, 1
    %p166 = por %p164, %p165
    %p167 = scmp.ne.s32.totalorder %s156, %s157
    %p168 = scmp.eq.s32.totalorder %s17, 0
    %p169 = por %p167, %p168
    %p170 = scmp.ne.s32.totalorder %s156, %s157
    %p171 = scmp.eq.s32.totalorder %s18, 1
    %p172 = por %p170, %p171
    %p174 = scmp.ne.s32.totalorder %s157, %s173
    %p175 = scmp.eq.s32.totalorder %s18, 0
    %p176 = por %p174, %p175
    %p177 = scmp.le.s32.totalorder 1, %s12
    %p178 = scmp.lt.s32.totalorder %s12, 3
    %p179 = pnand %p177, %p178
    %p180 = pneg %p179
    // Predicated region
    $region9: #{tpu_custom_call.1} parent=5 // pred_check
      _
    $region10: #{tpu_custom_call.1} parent=5 // pred_check_branch
      %182 = sbr.rel (%p179) target = $region12
    $region11: #{tpu_custom_call.1} parent=5 // pred_region
      %s183 = ssub.s32 %s12, 1
      // Predicated region
      $region13: #{tpu_custom_call.1} parent=11 // pred_check
        %p184 = pneg %p59
      $region14: #{tpu_custom_call.1} parent=11 // pred_check_branch
        %186 = sbr.rel (%p184) target = $region16
      $region15: #{tpu_custom_call.1} parent=11 // pred_region
        _
      $region16: #{tpu_custom_call.1} parent=11 // pred_fallthru
        _
      // Predicated region
      $region17: #{tpu_custom_call.1} parent=11 // pred_check
        %p187 = pneg %p80
      $region18: #{tpu_custom_call.1} parent=11 // pred_check_branch
        %189 = sbr.rel (%p187) target = $region20
      $region19: #{tpu_custom_call.1} parent=11 // pred_region
        _
      $region20: #{tpu_custom_call.1} parent=11 // pred_fallthru
        _
      // Predicated region
      $region21: #{tpu_custom_call.1} parent=11 // pred_check
        %p190 = pneg %p101
      $region22: #{tpu_custom_call.1} parent=11 // pred_check_branch
        %192 = sbr.rel (%p190) target = $region24
      $region23: #{tpu_custom_call.1} parent=11 // pred_region
        _
      $region24: #{tpu_custom_call.1} parent=11 // pred_fallthru
        _
      // Predicated region
      $region25: #{tpu_custom_call.1} parent=11 // pred_check
        %p193 = pneg %p122
      $region26: #{tpu_custom_call.1} parent=11 // pred_check_branch
        %195 = sbr.rel (%p193) target = $region28
      $region27: #{tpu_custom_call.1} parent=11 // pred_region
        _
      $region28: #{tpu_custom_call.1} parent=11 // pred_fallthru
        _
      // Predicated region
      $region29: #{tpu_custom_call.1} parent=11 // pred_check
        %p196 = pneg %p143
      $region30: #{tpu_custom_call.1} parent=11 // pred_check_branch
        %198 = sbr.rel (%p196) target = $region32
      $region31: #{tpu_custom_call.1} parent=11 // pred_region
        _
      $region32: #{tpu_custom_call.1} parent=11 // pred_fallthru
        _
    $region12: #{tpu_custom_call.1} parent=5 // pred_fallthru
      _
    %p199 = scmp.lt.s32.totalorder %s12, 2
    // Predicated region
    $region33: #{tpu_custom_call.1} parent=5 // pred_check
      %p200 = pneg %p199
    $region34: #{tpu_custom_call.1} parent=5 // pred_check_branch
      %202 = sbr.rel (%p200) target = $region36
    $region35: #{tpu_custom_call.1} parent=5 // pred_region
      // Predicated region
      $region37: #{tpu_custom_call.1} parent=35 // pred_check
        %p203 = pneg %p32
      $region38: #{tpu_custom_call.1} parent=35 // pred_check_branch
        %205 = sbr.rel (%p203) target = $region40
      $region39: #{tpu_custom_call.1} parent=35 // pred_region
        %p206 = scmp.lt.s32.totalorder %s12, 1
        %s207 = scalar_select %p206, %s12, 1
        %s208 = smul.addr %s207, 64
        %s209 = smul.addr %s208, 4
        %s210 = scalar_lea.vmem %s0, %s209
      $region40: #{tpu_custom_call.1} parent=35 // pred_fallthru
        _
    $region36: #{tpu_custom_call.1} parent=5 // pred_fallthru
      _
    %p211 = scmp.le.s32.totalorder 1, %s12
    %p212 = scmp.lt.s32.totalorder %s12, 3
    %p213 = pnand %p211, %p212
    %p214 = pneg %p213
    // Predicated region
    $region41: #{tpu_custom_call.1} parent=5 // pred_check
      _
    $region42: #{tpu_custom_call.1} parent=5 // pred_check_branch
      %216 = sbr.rel (%p213) target = $region44
    $region43: #{tpu_custom_call.1} parent=5 // pred_region
      %s217 = ssub.s32 %s12, 1
      %p218 = scmp.lt.s32.totalorder %s17, 1
      %s219 = scalar_select %p218, %s17, 1
      %s220 = smul.addr %s219, 64
      %s221 = smul.addr %s220, 4
      %s222 = scalar_lea.vmem %s0, %s221
      %p223 = pneg %p38
      %p224 = pneg %p35
      %p225 = pneg %p59
      %p226 = pneg %p56
      %p227 = pneg %p80
      %p228 = pneg %p77
      %p229 = pneg %p101
      %p230 = pneg %p98
      %p231 = pneg %p122
      %p232 = pneg %p119
      %p233 = pneg %p143
      %p234 = pneg %p140
      %p235 = pneg %p169
      %p236 = pneg %p166
      %p237 = scmp.lt.s32.totalorder %s17, 1
      %s238 = scalar_select %p237, %s17, 1
      %s239 = smul.addr %s238, 32
      %s240 = smul.addr %s239, 4
      %s241 = scalar_lea.vmem %s6, %s240
      %p242 = scmp.lt.s32.totalorder %s17, 1
      %s243 = scalar_select %p242, %s17, 1
      %s244 = smul.addr %s243, 64
      %s245 = smul.addr %s244, 4
      %s246 = scalar_lea.vmem %s0, %s245
      %p247 = scmp.lt.s32.totalorder %s17, 1
      %s248 = scalar_select %p247, %s17, 1
      %s249 = smul.addr %s248, 32
      %s250 = smul.addr %s249, 4
      %s251 = scalar_lea.vmem %s6, %s250
      %v253 = vld [vmem:[%s246] sm:$0xff]
      %v254 = vld [vmem:[%s246 + $0x8] sm:$0xff]
      %v255 = vld [vmem:[%s246 + $0x10] sm:$0xff]
      %v256 = vld [vmem:[%s246 + $0x18] sm:$0xff]
      %v257 = vld [vmem:[%s246 + $0x20] sm:$0xff]
      %v258 = vld [vmem:[%s246 + $0x28] sm:$0xff]
      %v259 = vld [vmem:[%s246 + $0x30] sm:$0xff]
      %v260 = vld [vmem:[%s246 + $0x38] sm:$0xff]
      %v261 = vld [vmem:[%s246 + $0x40] sm:$0xff]
      %v262 = vld [vmem:[%s246 + $0x48] sm:$0xff]
      %v263 = vld [vmem:[%s246 + $0x50] sm:$0xff]
      %v264 = vld [vmem:[%s246 + $0x58] sm:$0xff]
      %v265 = vld [vmem:[%s246 + $0x60] sm:$0xff]
      %v266 = vld [vmem:[%s246 + $0x68] sm:$0xff]
      %v267 = vld [vmem:[%s246 + $0x70] sm:$0xff]
      %v268 = vld [vmem:[%s246 + $0x78] sm:$0xff]
      %v269 = vld [vmem:[%s246 + $0x80] sm:$0xff]
      %v270 = vld [vmem:[%s246 + $0x88] sm:$0xff]
      %v271 = vld [vmem:[%s246 + $0x90] sm:$0xff]
      %v272 = vld [vmem:[%s246 + $0x98] sm:$0xff]
      %v273 = vld [vmem:[%s246 + $0xa0] sm:$0xff]
      %v274 = vld [vmem:[%s246 + $0xa8] sm:$0xff]
      %v275 = vld [vmem:[%s246 + $0xb0] sm:$0xff]
      %v276 = vld [vmem:[%s246 + $0xb8] sm:$0xff]
      %v277 = vld [vmem:[%s246 + $0xc0] sm:$0xff]
      %v278 = vld [vmem:[%s246 + $0xc8] sm:$0xff]
      %v279 = vld [vmem:[%s246 + $0xd0] sm:$0xff]
      %v280 = vld [vmem:[%s246 + $0xd8] sm:$0xff]
      %v281 = vld [vmem:[%s246 + $0xe0] sm:$0xff]
      %v282 = vld [vmem:[%s246 + $0xe8] sm:$0xff]
      %v283 = vld [vmem:[%s246 + $0xf0] sm:$0xff]
      %v284 = vld [vmem:[%s246 + $0xf8] sm:$0xff]
      %v285 = vld [vmem:[%s1] sm:$0xf]
      %v286 = vld [vmem:[%s1 + $0x4] sm:$0xf]
      %v287 = vld [vmem:[%s1 + $0x8] sm:$0xf]
      %v288 = vld [vmem:[%s1 + $0xc] sm:$0xf]
      %v289 = vld [vmem:[%s1 + $0x10] sm:$0xf]
      %v290 = vld [vmem:[%s1 + $0x14] sm:$0xf]
      %v291 = vld [vmem:[%s1 + $0x18] sm:$0xf]
      %v292 = vld [vmem:[%s1 + $0x1c] sm:$0xf]
      %v293 = vld [vmem:[%s1 + $0x20] sm:$0xf]
      %v294 = vld [vmem:[%s1 + $0x24] sm:$0xf]
      %v295 = vld [vmem:[%s1 + $0x28] sm:$0xf]
      %v296 = vld [vmem:[%s1 + $0x2c] sm:$0xf]
      %v297 = vld [vmem:[%s1 + $0x30] sm:$0xf]
      %v298 = vld [vmem:[%s1 + $0x34] sm:$0xf]
      %v299 = vld [vmem:[%s1 + $0x38] sm:$0xf]
      %v300 = vld [vmem:[%s1 + $0x3c] sm:$0xf]
      %v301 = vld [vmem:[%s1 + $0x40] sm:$0xf]
      %v302 = vld [vmem:[%s1 + $0x44] sm:$0xf]
      %v303 = vld [vmem:[%s1 + $0x48] sm:$0xf]
      %v304 = vld [vmem:[%s1 + $0x4c] sm:$0xf]
      %v337 = vunpack.c.l.b16 %v253
      %v338 = vunpack.c.h.b16 %v253
      %v339 = vunpack.c.l.b16 %v254
      %v340 = vunpack.c.h.b16 %v254
      %v341 = vunpack.c.l.b16 %v255
      %v342 = vunpack.c.h.b16 %v255
      %v343 = vunpack.c.l.b16 %v256
      %v344 = vunpack.c.h.b16 %v256
      %v345 = vunpack.c.l.b16 %v257
      %v346 = vunpack.c.h.b16 %v257
      %v347 = vunpack.c.l.b16 %v258
      %v348 = vunpack.c.h.b16 %v258
      %v349 = vunpack.c.l.b16 %v259
      %v350 = vunpack.c.h.b16 %v259
      %v351 = vunpack.c.l.b16 %v260
      %v352 = vunpack.c.h.b16 %v260
      %v353 = vunpack.c.l.b16 %v261
      %v354 = vunpack.c.h.b16 %v261
      %v355 = vunpack.c.l.b16 %v262
      %v356 = vunpack.c.h.b16 %v262
      %v357 = vunpack.c.l.b16 %v263
      %v358 = vunpack.c.h.b16 %v263
      %v359 = vunpack.c.l.b16 %v264
      %v360 = vunpack.c.h.b16 %v264
      %v361 = vunpack.c.l.b16 %v265
      %v362 = vunpack.c.h.b16 %v265
      %v363 = vunpack.c.l.b16 %v266
      %v364 = vunpack.c.h.b16 %v266
      %v365 = vunpack.c.l.b16 %v267
      %v366 = vunpack.c.h.b16 %v267
      %v367 = vunpack.c.l.b16 %v268
      %v368 = vunpack.c.h.b16 %v268
      %v369 = vunpack.c.l.b16 %v269
      %v370 = vunpack.c.h.b16 %v269
      %v371 = vunpack.c.l.b16 %v270
      %v372 = vunpack.c.h.b16 %v270
      %v373 = vunpack.c.l.b16 %v271
      %v374 = vunpack.c.h.b16 %v271
      %v375 = vunpack.c.l.b16 %v272
      %v376 = vunpack.c.h.b16 %v272
      %v377 = vunpack.c.l.b16 %v273
      %v378 = vunpack.c.h.b16 %v273
      %v379 = vunpack.c.l.b16 %v274
      %v380 = vunpack.c.h.b16 %v274
      %v381 = vunpack.c.l.b16 %v275
      %v382 = vunpack.c.h.b16 %v275
      %v383 = vunpack.c.l.b16 %v276
      %v384 = vunpack.c.h.b16 %v276
      %v385 = vunpack.c.l.b16 %v277
      %v386 = vunpack.c.h.b16 %v277
      %v387 = vunpack.c.l.b16 %v278
      %v388 = vunpack.c.h.b16 %v278
      %v389 = vunpack.c.l.b16 %v279
      %v390 = vunpack.c.h.b16 %v279
      %v391 = vunpack.c.l.b16 %v280
      %v392 = vunpack.c.h.b16 %v280
      %v393 = vunpack.c.l.b16 %v281
      %v394 = vunpack.c.h.b16 %v281
      %v395 = vunpack.c.l.b16 %v282
      %v396 = vunpack.c.h.b16 %v282
      %v397 = vunpack.c.l.b16 %v283
      %v398 = vunpack.c.h.b16 %v283
      %v399 = vunpack.c.l.b16 %v284
      %v400 = vunpack.c.h.b16 %v284
      %v401 = vpack.c.b16 %v339, %v337
      %v402 = vpack.c.b16 %v340, %v338
      %v403 = vpack.c.b16 %v343, %v341
      %v404 = vpack.c.b16 %v344, %v342
      %v405 = vpack.c.b16 %v347, %v345
      %v406 = vpack.c.b16 %v348, %v346
      %v407 = vpack.c.b16 %v351, %v349
      %v408 = vpack.c.b16 %v352, %v350
      %v409 = vpack.c.b16 %v355, %v353
      %v410 = vpack.c.b16 %v356, %v354
      %v411 = vpack.c.b16 %v359, %v357
      %v412 = vpack.c.b16 %v360, %v358
      %v413 = vpack.c.b16 %v363, %v361
      %v414 = vpack.c.b16 %v364, %v362
      %v415 = vpack.c.b16 %v367, %v365
      %v416 = vpack.c.b16 %v368, %v366
      %v417 = vpack.c.b16 %v371, %v369
      %v418 = vpack.c.b16 %v372, %v370
      %v419 = vpack.c.b16 %v375, %v373
      %v420 = vpack.c.b16 %v376, %v374
      %v421 = vpack.c.b16 %v379, %v377
      %v422 = vpack.c.b16 %v380, %v378
      %v423 = vpack.c.b16 %v383, %v381
      %v424 = vpack.c.b16 %v384, %v382
      %v425 = vpack.c.b16 %v387, %v385
      %v426 = vpack.c.b16 %v388, %v386
      %v427 = vpack.c.b16 %v391, %v389
      %v428 = vpack.c.b16 %v392, %v390
      %v429 = vpack.c.b16 %v395, %v393
      %v430 = vpack.c.b16 %v396, %v394
      %v431 = vpack.c.b16 %v399, %v397
      %v432 = vpack.c.b16 %v400, %v398
      %v469 = vunpack.c.l.b16 %v285
      %v470 = vunpack.c.l.b16 %v286
      %v471 = vunpack.c.l.b16 %v287
      %v472 = vunpack.c.l.b16 %v288
      %v473 = vunpack.c.l.b16 %v289
      %v474 = vunpack.c.l.b16 %v290
      %v475 = vunpack.c.l.b16 %v291
      %v476 = vunpack.c.l.b16 %v292
      %v477 = vunpack.c.l.b16 %v293
      %v478 = vunpack.c.l.b16 %v294
      %v479 = vunpack.c.l.b16 %v295
      %v480 = vunpack.c.l.b16 %v296
      %v481 = vunpack.c.l.b16 %v297
      %v482 = vunpack.c.l.b16 %v298
      %v483 = vunpack.c.l.b16 %v299
      %v484 = vunpack.c.l.b16 %v300
      %v485 = vunpack.c.l.b16 %v301
      %v486 = vunpack.c.l.b16 %v302
      %v487 = vunpack.c.l.b16 %v303
      %v488 = vunpack.c.l.b16 %v304
      %v489 = vpack.c.b16 %v470, %v469
      %v490 = vpack.c.b16 %v472, %v471
      %v491 = vpack.c.b16 %v474, %v473
      %v492 = vpack.c.b16 %v476, %v475
      %v493 = vpack.c.b16 %v478, %v477
      %v494 = vpack.c.b16 %v480, %v479
      %v495 = vpack.c.b16 %v482, %v481
      %v496 = vpack.c.b16 %v484, %v483
      %v497 = vpack.c.b16 %v486, %v485
      %v498 = vpack.c.b16 %v488, %v487
      %vm509 = vcmask 261120
      %v511 = vsel %vm509, %v402, 0
      %v514 = vsel %vm509, %v404, 0
      %v517 = vsel %vm509, %v406, 0
      %v520 = vsel %vm509, %v408, 0
      %v523 = vsel %vm509, %v410, 0
      %v526 = vsel %vm509, %v412, 0
      %v529 = vsel %vm509, %v414, 0
      %v532 = vsel %vm509, %v416, 0
      %v535 = vsel %vm509, %v418, 0
      %v538 = vsel %vm509, %v420, 0
      %v541 = vsel %vm509, %v422, 0
      %v544 = vsel %vm509, %v424, 0
      %v547 = vsel %vm509, %v426, 0
      %v550 = vsel %vm509, %v428, 0
      %v553 = vsel %vm509, %v430, 0
      %v556 = vsel %vm509, %v432, 0
      %558 = vmatprep.subr.bf16.mxu0 0
      %559 = vmatpush1.bf16.msra.mxu0 %v496
      %560 = vmatprep.subr.bf16.mxu0 0
      %561 = vmatpush1.bf16.msra.mxu0 %v495
      %562 = vmatprep.subr.bf16.mxu0 0
      %563 = vmatpush1.bf16.msra.mxu0 %v494
      %564 = vmatprep.subr.bf16.mxu0 0
      %565 = vmatpush1.bf16.msra.mxu0 %v493
      %566 = vmatprep.subr.bf16.mxu0 0
      %567 = vmatpush1.bf16.msra.mxu0 %v492
      %568 = vmatprep.subr.bf16.mxu0 0
      %569 = vmatpush1.bf16.msra.mxu0 %v491
      %570 = vmatprep.subr.bf16.mxu0 0
      %571 = vmatpush1.bf16.msra.mxu0 %v490
      %572 = vmatprep.subr.bf16.mxu0 0
      %573 = vmatpush1.bf16.msra.mxu0 %v489
      %574 = vmatprep.subr.bf16.mxu0 0
      %575 = vmatpush2.bf16.msra.mxu0 0
      %576 = vmatprep.subr.bf16.mxu0 0
      %577 = vmatpush2.bf16.msra.mxu0 0
      %578 = vmatprep.subr.bf16.mxu0 0
      %579 = vmatpush2.bf16.msra.mxu0 0
      %580 = vmatprep.subr.bf16.mxu0 0
      %581 = vmatpush2.bf16.msra.mxu0 0
      %582 = vmatprep.subr.bf16.mxu0 0
      %583 = vmatpush2.bf16.msra.mxu0 0
      %584 = vmatprep.subr.bf16.mxu0 0
      %585 = vmatpush2.bf16.msra.mxu0 0
      %586 = vmatprep.subr.bf16.mxu0 0
      %587 = vmatpush2.bf16.msra.mxu0 %v498
      %588 = vmatprep.subr.bf16.mxu0 0
      %589 = vmatpush2.bf16.msra.mxu0 %v497
      %590 = vmatprep.mubr.bf16.mxu0 %v511
      %591 = vmatmul.mubr.bf16.gmra.mxu0 %v401
      %v592 = vpop.f32.mrf.mxu0
      %v593 = vadd.f32 0.0, %v592
      %v594 = vpop.f32.mrf.mxu0
      %v595 = vpop.f32.mrf.mxu0
      %v596 = vadd.f32 0.0, %v595
      %v597 = vpop.f32.mrf.mxu0
      %598 = vmatprep.mubr.bf16.mxu0 %v514
      %599 = vmatmul.mubr.bf16.gmra.mxu0 %v403
      %v600 = vpop.f32.mrf.mxu0
      %v601 = vadd.f32 0.0, %v600
      %v602 = vpop.f32.mrf.mxu0
      %v603 = vpop.f32.mrf.mxu0
      %v604 = vadd.f32 0.0, %v603
      %v605 = vpop.f32.mrf.mxu0
      %606 = vmatprep.mubr.bf16.mxu0 %v517
      %607 = vmatmul.mubr.bf16.gmra.mxu0 %v405
      %v608 = vpop.f32.mrf.mxu0
      %v609 = vadd.f32 0.0, %v608
      %v610 = vpop.f32.mrf.mxu0
      %v611 = vpop.f32.mrf.mxu0
      %v612 = vadd.f32 0.0, %v611
      %v613 = vpop.f32.mrf.mxu0
      %614 = vmatprep.mubr.bf16.mxu0 %v520
      %615 = vmatmul.mubr.bf16.gmra.mxu0 %v407
      %v616 = vpop.f32.mrf.mxu0
      %v617 = vadd.f32 0.0, %v616
      %v618 = vpop.f32.mrf.mxu0
      %v619 = vpop.f32.mrf.mxu0
      %v620 = vadd.f32 0.0, %v619
      %v621 = vpop.f32.mrf.mxu0
      %622 = vmatprep.mubr.bf16.mxu0 %v523
      %623 = vmatmul.mubr.bf16.gmra.mxu0 %v409
      %v624 = vpop.f32.mrf.mxu0
      %v625 = vadd.f32 0.0, %v624
      %v626 = vpop.f32.mrf.mxu0
      %v627 = vpop.f32.mrf.mxu0
      %v628 = vadd.f32 0.0, %v627
      %v629 = vpop.f32.mrf.mxu0
      %630 = vmatprep.mubr.bf16.mxu0 %v526
      %631 = vmatmul.mubr.bf16.gmra.mxu0 %v411
      %v632 = vpop.f32.mrf.mxu0
      %v633 = vadd.f32 0.0, %v632
      %v634 = vpop.f32.mrf.mxu0
      %v635 = vpop.f32.mrf.mxu0
      %v636 = vadd.f32 0.0, %v635
      %v637 = vpop.f32.mrf.mxu0
      %638 = vmatprep.mubr.bf16.mxu0 %v529
      %639 = vmatmul.mubr.bf16.gmra.mxu0 %v413
      %v640 = vpop.f32.mrf.mxu0
      %v641 = vadd.f32 0.0, %v640
      %v642 = vpop.f32.mrf.mxu0
      %v643 = vpop.f32.mrf.mxu0
      %v644 = vadd.f32 0.0, %v643
      %v645 = vpop.f32.mrf.mxu0
      %646 = vmatprep.mubr.bf16.mxu0 %v532
      %647 = vmatmul.mubr.bf16.gmra.mxu0 %v415
      %v648 = vpop.f32.mrf.mxu0
      %v649 = vadd.f32 0.0, %v648
      %v650 = vpop.f32.mrf.mxu0
      %v651 = vpop.f32.mrf.mxu0
      %v652 = vadd.f32 0.0, %v651
      %v653 = vpop.f32.mrf.mxu0
      %654 = vmatprep.mubr.bf16.mxu0 %v535
      %655 = vmatmul.mubr.bf16.gmra.mxu0 %v417
      %v656 = vpop.f32.mrf.mxu0
      %v657 = vadd.f32 0.0, %v656
      %v658 = vpop.f32.mrf.mxu0
      %v659 = vpop.f32.mrf.mxu0
      %v660 = vadd.f32 0.0, %v659
      %v661 = vpop.f32.mrf.mxu0
      %662 = vmatprep.mubr.bf16.mxu0 %v538
      %663 = vmatmul.mubr.bf16.gmra.mxu0 %v419
      %v664 = vpop.f32.mrf.mxu0
      %v665 = vadd.f32 0.0, %v664
      %v666 = vpop.f32.mrf.mxu0
      %v667 = vpop.f32.mrf.mxu0
      %v668 = vadd.f32 0.0, %v667
      %v669 = vpop.f32.mrf.mxu0
      %670 = vmatprep.mubr.bf16.mxu0 %v541
      %671 = vmatmul.mubr.bf16.gmra.mxu0 %v421
      %v672 = vpop.f32.mrf.mxu0
      %v673 = vadd.f32 0.0, %v672
      %v674 = vpop.f32.mrf.mxu0
      %v675 = vpop.f32.mrf.mxu0
      %v676 = vadd.f32 0.0, %v675
      %v677 = vpop.f32.mrf.mxu0
      %678 = vmatprep.mubr.bf16.mxu0 %v544
      %679 = vmatmul.mubr.bf16.gmra.mxu0 %v423
      %v680 = vpop.f32.mrf.mxu0
      %v681 = vadd.f32 0.0, %v680
      %v682 = vpop.f32.mrf.mxu0
      %v683 = vpop.f32.mrf.mxu0
      %v684 = vadd.f32 0.0, %v683
      %v685 = vpop.f32.mrf.mxu0
      %686 = vmatprep.mubr.bf16.mxu0 %v547
      %687 = vmatmul.mubr.bf16.gmra.mxu0 %v425
      %v688 = vpop.f32.mrf.mxu0
      %v689 = vadd.f32 0.0, %v688
      %v690 = vpop.f32.mrf.mxu0
      %v691 = vpop.f32.mrf.mxu0
      %v692 = vadd.f32 0.0, %v691
      %v693 = vpop.f32.mrf.mxu0
      %694 = vmatprep.mubr.bf16.mxu0 %v550
      %695 = vmatmul.mubr.bf16.gmra.mxu0 %v427
      %v696 = vpop.f32.mrf.mxu0
      %v697 = vadd.f32 0.0, %v696
      %v698 = vpop.f32.mrf.mxu0
      %v699 = vpop.f32.mrf.mxu0
      %v700 = vadd.f32 0.0, %v699
      %v701 = vpop.f32.mrf.mxu0
      %702 = vmatprep.mubr.bf16.mxu0 %v553
      %703 = vmatmul.mubr.bf16.gmra.mxu0 %v429
      %v704 = vpop.f32.mrf.mxu0
      %v705 = vadd.f32 0.0, %v704
      %v706 = vpop.f32.mrf.mxu0
      %v707 = vpop.f32.mrf.mxu0
      %v708 = vadd.f32 0.0, %v707
      %v709 = vpop.f32.mrf.mxu0
      %710 = vmatprep.mubr.bf16.mxu0 %v556
      %711 = vmatmul.mubr.bf16.gmra.mxu0 %v431
      %v712 = vpop.f32.mrf.mxu0
      %v713 = vadd.f32 0.0, %v712
      %v714 = vpop.f32.mrf.mxu0
      %v715 = vpop.f32.mrf.mxu0
      %v716 = vadd.f32 0.0, %v715
      %v717 = vpop.f32.mrf.mxu0
      %718 = vdwg.mxu0
      %v719 = vld [vmem:[%s2] sm:$0x1]
      %vm720 = vcmask 523264
      %v721 = vsel %vm720, %v593, 0.0
      %v722 = vsel %vm720, %v596, 0.0
      %v723 = vadd.f32 %v721, %v722
      %v724 = vsel %vm720, %v601, 0.0
      %v725 = vadd.f32 %v723, %v724
      %v726 = vsel %vm720, %v604, 0.0
      %v727 = vadd.f32 %v725, %v726
      %v728 = vsel %vm720, %v609, 0.0
      %v729 = vadd.f32 %v727, %v728
      %v730 = vsel %vm720, %v612, 0.0
      %v731 = vadd.f32 %v729, %v730
      %v732 = vsel %vm720, %v617, 0.0
      %v733 = vadd.f32 %v731, %v732
      %v734 = vsel %vm720, %v620, 0.0
      %v735 = vadd.f32 %v733, %v734
      %v736 = vsel %vm720, %v625, 0.0
      %v737 = vadd.f32 %v735, %v736
      %v738 = vsel %vm720, %v628, 0.0
      %v739 = vadd.f32 %v737, %v738
      %v740 = vsel %vm720, %v633, 0.0
      %v741 = vadd.f32 %v739, %v740
      %v742 = vsel %vm720, %v636, 0.0
      %v743 = vadd.f32 %v741, %v742
      %v744 = vsel %vm720, %v641, 0.0
      %v745 = vadd.f32 %v743, %v744
      %v746 = vsel %vm720, %v644, 0.0
      %v747 = vadd.f32 %v745, %v746
      %v748 = vsel %vm720, %v649, 0.0
      %v749 = vadd.f32 %v747, %v748
      %v750 = vsel %vm720, %v652, 0.0
      %v751 = vadd.f32 %v749, %v750
      %v752 = vsel %vm720, %v657, 0.0
      %v753 = vadd.f32 %v751, %v752
      %v754 = vsel %vm720, %v660, 0.0
      %v755 = vadd.f32 %v753, %v754
      %v756 = vsel %vm720, %v665, 0.0
      %v757 = vadd.f32 %v755, %v756
      %v758 = vsel %vm720, %v668, 0.0
      %v759 = vadd.f32 %v757, %v758
      %v760 = vsel %vm720, %v673, 0.0
      %v761 = vadd.f32 %v759, %v760
      %v762 = vsel %vm720, %v676, 0.0
      %v763 = vadd.f32 %v761, %v762
      %v764 = vsel %vm720, %v681, 0.0
      %v765 = vadd.f32 %v763, %v764
      %v766 = vsel %vm720, %v684, 0.0
      %v767 = vadd.f32 %v765, %v766
      %v768 = vsel %vm720, %v689, 0.0
      %v769 = vadd.f32 %v767, %v768
      %v770 = vsel %vm720, %v692, 0.0
      %v771 = vadd.f32 %v769, %v770
      %v772 = vsel %vm720, %v697, 0.0
      %v773 = vadd.f32 %v771, %v772
      %v774 = vsel %vm720, %v700, 0.0
      %v775 = vadd.f32 %v773, %v774
      %v776 = vsel %vm720, %v705, 0.0
      %v777 = vadd.f32 %v775, %v776
      %v778 = vsel %vm720, %v708, 0.0
      %v779 = vadd.f32 %v777, %v778
      %v780 = vsel %vm720, %v713, 0.0
      %v781 = vadd.f32 %v779, %v780
      %v782 = vsel %vm720, %v716, 0.0
      %v783 = vadd.f32 %v781, %v782
      %v784 = vrot.slane %v783, 4
      %v785 = vadd.f32 %v783, %v784
      %v786 = vrot.slane %v785, 2
      %v787 = vadd.f32 %v785, %v786
      %v788 = vrot.slane %v787, 1
      %v789 = vadd.f32 %v787, %v788
      %v790 = vmul.f32 %v789, 0.00390625
      %v791 = vadd.f32 %v790, %v719
      %v792 = vld [vmem:[%s5] sm:$0xff]
      %v793 = vld [vmem:[%s5 + $0x8] sm:$0xff]
      %v794 = vld [vmem:[%s5 + $0x10] sm:$0xff]
      %v795 = vld [vmem:[%s5 + $0x18] sm:$0xff]
      %v796 = vld [vmem:[%s5 + $0x20] sm:$0xff]
      %v797 = vld [vmem:[%s5 + $0x28] sm:$0xff]
      %v798 = vld [vmem:[%s5 + $0x30] sm:$0xff]
      %v799 = vld [vmem:[%s5 + $0x38] sm:$0xff]
      %v801 = vsel %vm720, %v791, 0
      %803 = vmatprep.subr.mxu0 0.0
      %804 = vmatpush1.msra.mxu0 0.0
      %805 = vmatprep.subr.mxu0 0.0
      %806 = vmatpush1.msra.mxu0 0.0
      %807 = vmatprep.subr.mxu0 0.0
      %808 = vmatpush1.msra.mxu0 0.0
      %809 = vmatprep.subr.mxu0 0.0
      %810 = vmatpush1.msra.mxu0 0.0
      %811 = vmatprep.subr.mxu0 0.0
      %812 = vmatpush1.msra.mxu0 0.0
      %813 = vmatprep.subr.mxu0 0.0
      %814 = vmatpush1.msra.mxu0 0.0
      %815 = vmatprep.subr.mxu0 0.0
      %816 = vmatpush1.msra.mxu0 0.0
      %817 = vmatprep.subr.mxu0 0.0
      %818 = vmatpush1.msra.mxu0 0.0
      %819 = vmatprep.subr.mxu0 0.0
      %820 = vmatpush1.msra.mxu0 %v799
      %821 = vmatprep.subr.mxu0 0.0
      %822 = vmatpush1.msra.mxu0 %v798
      %823 = vmatprep.subr.mxu0 0.0
      %824 = vmatpush1.msra.mxu0 %v797
      %825 = vmatprep.subr.mxu0 0.0
      %826 = vmatpush1.msra.mxu0 %v796
      %827 = vmatprep.subr.mxu0 0.0
      %828 = vmatpush1.msra.mxu0 %v795
      %829 = vmatprep.subr.mxu0 0.0
      %830 = vmatpush1.msra.mxu0 %v794
      %831 = vmatprep.subr.mxu0 0.0
      %832 = vmatpush1.msra.mxu0 %v793
      %833 = vmatprep.subr.mxu0 0.0
      %834 = vmatpush1.msra.mxu0 %v792
      %835 = vmatprep.subr.mxu0 0.0
      %836 = vmatpush2.msra.mxu0 0.0
      %837 = vmatprep.subr.mxu0 0.0
      %838 = vmatpush2.msra.mxu0 0.0
      %839 = vmatprep.subr.mxu0 0.0
      %840 = vmatpush2.msra.mxu0 0.0
      %841 = vmatprep.subr.mxu0 0.0
      %842 = vmatpush2.msra.mxu0 0.0
      %843 = vmatprep.subr.mxu0 0.0
      %844 = vmatpush2.msra.mxu0 0.0
      %845 = vmatprep.subr.mxu0 0.0
      %846 = vmatpush2.msra.mxu0 0.0
      %847 = vmatprep.subr.mxu0 0.0
      %848 = vmatpush2.msra.mxu0 0.0
      %849 = vmatprep.subr.mxu0 0.0
      %850 = vmatpush2.msra.mxu0 0.0
      %851 = vmatprep.subr.mxu0 0.0
      %852 = vmatpush2.msra.mxu0 0.0
      %853 = vmatprep.subr.mxu0 0.0
      %854 = vmatpush2.msra.mxu0 0.0
      %855 = vmatprep.subr.mxu0 0.0
      %856 = vmatpush2.msra.mxu0 0.0
      %857 = vmatprep.subr.mxu0 0.0
      %858 = vmatpush2.msra.mxu0 0.0
      %859 = vmatprep.subr.mxu0 0.0
      %860 = vmatpush2.msra.mxu0 0.0
      %861 = vmatprep.subr.mxu0 0.0
      %862 = vmatpush2.msra.mxu0 0.0
      %863 = vmatprep.subr.mxu0 0.0
      %864 = vmatpush2.msra.mxu0 0.0
      %865 = vmatprep.subr.mxu0 0.0
      %866 = vmatpush2.msra.mxu0 0.0
      %867 = vmatprep.mubr.f32.mxu0 0.0
      %868 = vmatmul.mubr.f32.gmra.mxu0 %v801
      %v869 = vpop.f32.mrf.mxu0
      %v870 = vadd.f32 0.0, %v869
      %v871 = vpop.f32.mrf.mxu0
      %872 = vdwg.mxu0
      %v873 = vsub.f32 %v870, %v719
      %v874 = vlaneseq
      %v875 = vshrl.u32 %v874, 7
      %v876 = vsub.s32 0, %v875
      %v877 = vrot.slane %v873, %v876
      %v878 = vsub.f32 %v593, %v877
      %v879 = vsub.f32 %v596, %v877
      %v880 = vsub.f32 %v601, %v877
      %v881 = vsub.f32 %v604, %v877
      %v882 = vsub.f32 %v609, %v877
      %v883 = vsub.f32 %v612, %v877
      %v884 = vsub.f32 %v617, %v877
      %v885 = vsub.f32 %v620, %v877
      %v886 = vsub.f32 %v625, %v877
      %v887 = vsub.f32 %v628, %v877
      %v888 = vsub.f32 %v633, %v877
      %v889 = vsub.f32 %v636, %v877
      %v890 = vsub.f32 %v641, %v877
      %v891 = vsub.f32 %v644, %v877
      %v892 = vsub.f32 %v649, %v877
      %v893 = vsub.f32 %v652, %v877
      %v894 = vsub.f32 %v657, %v877
      %v895 = vsub.f32 %v660, %v877
      %v896 = vsub.f32 %v665, %v877
      %v897 = vsub.f32 %v668, %v877
      %v898 = vsub.f32 %v673, %v877
      %v899 = vsub.f32 %v676, %v877
      %v900 = vsub.f32 %v681, %v877
      %v901 = vsub.f32 %v684, %v877
      %v902 = vsub.f32 %v689, %v877
      %v903 = vsub.f32 %v692, %v877
      %v904 = vsub.f32 %v697, %v877
      %v905 = vsub.f32 %v700, %v877
      %v906 = vsub.f32 %v705, %v877
      %v907 = vsub.f32 %v708, %v877
      %v908 = vsub.f32 %v713, %v877
      %v909 = vsub.f32 %v716, %v877
      %v910 = vmul.f32 %v878, %v878
      %v911 = vmul.f32 %v879, %v879
      %v912 = vmul.f32 %v880, %v880
      %v913 = vmul.f32 %v881, %v881
      %v914 = vmul.f32 %v882, %v882
      %v915 = vmul.f32 %v883, %v883
      %v916 = vmul.f32 %v884, %v884
      %v917 = vmul.f32 %v885, %v885
      %v918 = vmul.f32 %v886, %v886
      %v919 = vmul.f32 %v887, %v887
      %v920 = vmul.f32 %v888, %v888
      %v921 = vmul.f32 %v889, %v889
      %v922 = vmul.f32 %v890, %v890
      %v923 = vmul.f32 %v891, %v891
      %v924 = vmul.f32 %v892, %v892
      %v925 = vmul.f32 %v893, %v893
      %v926 = vmul.f32 %v894, %v894
      %v927 = vmul.f32 %v895, %v895
      %v928 = vmul.f32 %v896, %v896
      %v929 = vmul.f32 %v897, %v897
      %v930 = vmul.f32 %v898, %v898
      %v931 = vmul.f32 %v899, %v899
      %v932 = vmul.f32 %v900, %v900
      %v933 = vmul.f32 %v901, %v901
      %v934 = vmul.f32 %v902, %v902
      %v935 = vmul.f32 %v903, %v903
      %v936 = vmul.f32 %v904, %v904
      %v937 = vmul.f32 %v905, %v905
      %v938 = vmul.f32 %v906, %v906
      %v939 = vmul.f32 %v907, %v907
      %v940 = vmul.f32 %v908, %v908
      %v941 = vmul.f32 %v909, %v909
      %v942 = vsel %vm720, %v910, 0.0
      %v943 = vsel %vm720, %v911, 0.0
      %v944 = vadd.f32 %v942, %v943
      %v945 = vsel %vm720, %v912, 0.0
      %v946 = vadd.f32 %v944, %v945
      %v947 = vsel %vm720, %v913, 0.0
      %v948 = vadd.f32 %v946, %v947
      %v949 = vsel %vm720, %v914, 0.0
      %v950 = vadd.f32 %v948, %v949
      %v951 = vsel %vm720, %v915, 0.0
      %v952 = vadd.f32 %v950, %v951
      %v953 = vsel %vm720, %v916, 0.0
      %v954 = vadd.f32 %v952, %v953
      %v955 = vsel %vm720, %v917, 0.0
      %v956 = vadd.f32 %v954, %v955
      %v957 = vsel %vm720, %v918, 0.0
      %v958 = vadd.f32 %v956, %v957
      %v959 = vsel %vm720, %v919, 0.0
      %v960 = vadd.f32 %v958, %v959
      %v961 = vsel %vm720, %v920, 0.0
      %v962 = vadd.f32 %v960, %v961
      %v963 = vsel %vm720, %v921, 0.0
      %v964 = vadd.f32 %v962, %v963
      %v965 = vsel %vm720, %v922, 0.0
      %v966 = vadd.f32 %v964, %v965
      %v967 = vsel %vm720, %v923, 0.0
      %v968 = vadd.f32 %v966, %v967
      %v969 = vsel %vm720, %v924, 0.0
      %v970 = vadd.f32 %v968, %v969
      %v971 = vsel %vm720, %v925, 0.0
      %v972 = vadd.f32 %v970, %v971
      %v973 = vsel %vm720, %v926, 0.0
      %v974 = vadd.f32 %v972, %v973
      %v975 = vsel %vm720, %v927, 0.0
      %v976 = vadd.f32 %v974, %v975
      %v977 = vsel %vm720, %v928, 0.0
      %v978 = vadd.f32 %v976, %v977
      %v979 = vsel %vm720, %v929, 0.0
      %v980 = vadd.f32 %v978, %v979
      %v981 = vsel %vm720, %v930, 0.0
      %v982 = vadd.f32 %v980, %v981
      %v983 = vsel %vm720, %v931, 0.0
      %v984 = vadd.f32 %v982, %v983
      %v985 = vsel %vm720, %v932, 0.0
      %v986 = vadd.f32 %v984, %v985
      %v987 = vsel %vm720, %v933, 0.0
      %v988 = vadd.f32 %v986, %v987
      %v989 = vsel %vm720, %v934, 0.0
      %v990 = vadd.f32 %v988, %v989
      %v991 = vsel %vm720, %v935, 0.0
      %v992 = vadd.f32 %v990, %v991
      %v993 = vsel %vm720, %v936, 0.0
      %v994 = vadd.f32 %v992, %v993
      %v995 = vsel %vm720, %v937, 0.0
      %v996 = vadd.f32 %v994, %v995
      %v997 = vsel %vm720, %v938, 0.0
      %v998 = vadd.f32 %v996, %v997
      %v999 = vsel %vm720, %v939, 0.0
      %v1000 = vadd.f32 %v998, %v999
      %v1001 = vsel %vm720, %v940, 0.0
      %v1002 = vadd.f32 %v1000, %v1001
      %v1003 = vsel %vm720, %v941, 0.0
      %v1004 = vadd.f32 %v1002, %v1003
      %v1005 = vrot.slane %v1004, 4
      %v1006 = vadd.f32 %v1004, %v1005
      %v1007 = vrot.slane %v1006, 2
      %v1008 = vadd.f32 %v1006, %v1007
      %v1009 = vrot.slane %v1008, 1
      %v1010 = vadd.f32 %v1008, %v1009
      %v1012 = vsel %vm720, %v1010, 0
      %1014 = vmatprep.subr.mxu0 0.0
      %1015 = vmatpush1.msra.mxu0 0.0
      %1016 = vmatprep.subr.mxu0 0.0
      %1017 = vmatpush1.msra.mxu0 0.0
      %1018 = vmatprep.subr.mxu0 0.0
      %1019 = vmatpush1.msra.mxu0 0.0
      %1020 = vmatprep.subr.mxu0 0.0
      %1021 = vmatpush1.msra.mxu0 0.0
      %1022 = vmatprep.subr.mxu0 0.0
      %1023 = vmatpush1.msra.mxu0 0.0
      %1024 = vmatprep.subr.mxu0 0.0
      %1025 = vmatpush1.msra.mxu0 0.0
      %1026 = vmatprep.subr.mxu0 0.0
      %1027 = vmatpush1.msra.mxu0 0.0
      %1028 = vmatprep.subr.mxu0 0.0
      %1029 = vmatpush1.msra.mxu0 0.0
      %1030 = vmatprep.subr.mxu0 0.0
      %1031 = vmatpush1.msra.mxu0 %v799
      %1032 = vmatprep.subr.mxu0 0.0
      %1033 = vmatpush1.msra.mxu0 %v798
      %1034 = vmatprep.subr.mxu0 0.0
      %1035 = vmatpush1.msra.mxu0 %v797
      %1036 = vmatprep.subr.mxu0 0.0
      %1037 = vmatpush1.msra.mxu0 %v796
      %1038 = vmatprep.subr.mxu0 0.0
      %1039 = vmatpush1.msra.mxu0 %v795
      %1040 = vmatprep.subr.mxu0 0.0
      %1041 = vmatpush1.msra.mxu0 %v794
      %1042 = vmatprep.subr.mxu0 0.0
      %1043 = vmatpush1.msra.mxu0 %v793
      %1044 = vmatprep.subr.mxu0 0.0
      %1045 = vmatpush1.msra.mxu0 %v792
      %1046 = vmatprep.subr.mxu0 0.0
      %1047 = vmatpush2.msra.mxu0 0.0
      %1048 = vmatprep.subr.mxu0 0.0
      %1049 = vmatpush2.msra.mxu0 0.0
      %1050 = vmatprep.subr.mxu0 0.0
      %1051 = vmatpush2.msra.mxu0 0.0
      %1052 = vmatprep.subr.mxu0 0.0
      %1053 = vmatpush2.msra.mxu0 0.0
      %1054 = vmatprep.subr.mxu0 0.0
      %1055 = vmatpush2.msra.mxu0 0.0
      %1056 = vmatprep.subr.mxu0 0.0
      %1057 = vmatpush2.msra.mxu0 0.0
      %1058 = vmatprep.subr.mxu0 0.0
      %1059 = vmatpush2.msra.mxu0 0.0
      %1060 = vmatprep.subr.mxu0 0.0
      %1061 = vmatpush2.msra.mxu0 0.0
      %1062 = vmatprep.subr.mxu0 0.0
      %1063 = vmatpush2.msra.mxu0 0.0
      %1064 = vmatprep.subr.mxu0 0.0
      %1065 = vmatpush2.msra.mxu0 0.0
      %1066 = vmatprep.subr.mxu0 0.0
      %1067 = vmatpush2.msra.mxu0 0.0
      %1068 = vmatprep.subr.mxu0 0.0
      %1069 = vmatpush2.msra.mxu0 0.0
      %1070 = vmatprep.subr.mxu0 0.0
      %1071 = vmatpush2.msra.mxu0 0.0
      %1072 = vmatprep.subr.mxu0 0.0
      %1073 = vmatpush2.msra.mxu0 0.0
      %1074 = vmatprep.subr.mxu0 0.0
      %1075 = vmatpush2.msra.mxu0 0.0
      %1076 = vmatprep.subr.mxu0 0.0
      %1077 = vmatpush2.msra.mxu0 0.0
      %1078 = vmatprep.mubr.f32.mxu0 0.0
      %1079 = vmatmul.mubr.f32.gmra.mxu0 %v1012
      %v1080 = vpop.f32.mrf.mxu0
      %v1081 = vadd.f32 0.0, %v1080
      %v1082 = vpop.f32.mrf.mxu0
      %1083 = vdwg.mxu0
      %v1084 = vmul.f32 %v1081, 0.00390625
      %v1085 = vadd.f32 %v1084, 1e-05
      %v1086 = vrsqrt.pop %v1085
      %v1087 = vld [vmem:[%s3] sm:$0x1]
      %v1088 = vmul.f32 %v1087, %v1086
      %v1089 = vld [vmem:[%s4] sm:$0x1]
      %v1090 = vmul.f32 %v873, %v1088
      %v1091 = vsub.f32 %v1089, %v1090
      %v1093 = vlaneseq
      %v1094 = vshrl.u32 %v1093, 7
      %v1095 = vsub.s32 0, %v1094
      %v1096 = vrot.slane %v1088, %v1095
      %v1098 = vmul.f32 %v593, %v1096
      %v1099 = vmul.f32 %v596, %v1096
      %v1100 = vmul.f32 %v601, %v1096
      %v1101 = vmul.f32 %v604, %v1096
      %v1102 = vmul.f32 %v609, %v1096
      %v1103 = vmul.f32 %v612, %v1096
      %v1104 = vmul.f32 %v617, %v1096
      %v1105 = vmul.f32 %v620, %v1096
      %v1106 = vmul.f32 %v625, %v1096
      %v1107 = vmul.f32 %v628, %v1096
      %v1108 = vmul.f32 %v633, %v1096
      %v1109 = vmul.f32 %v636, %v1096
      %v1110 = vmul.f32 %v641, %v1096
      %v1111 = vmul.f32 %v644, %v1096
      %v1112 = vmul.f32 %v649, %v1096
      %v1113 = vmul.f32 %v652, %v1096
      %v1114 = vmul.f32 %v657, %v1096
      %v1115 = vmul.f32 %v660, %v1096
      %v1116 = vmul.f32 %v665, %v1096
      %v1117 = vmul.f32 %v668, %v1096
      %v1118 = vmul.f32 %v673, %v1096
      %v1119 = vmul.f32 %v676, %v1096
      %v1120 = vmul.f32 %v681, %v1096
      %v1121 = vmul.f32 %v684, %v1096
      %v1122 = vmul.f32 %v689, %v1096
      %v1123 = vmul.f32 %v692, %v1096
      %v1124 = vmul.f32 %v697, %v1096
      %v1125 = vmul.f32 %v700, %v1096
      %v1126 = vmul.f32 %v705, %v1096
      %v1127 = vmul.f32 %v708, %v1096
      %v1128 = vmul.f32 %v713, %v1096
      %v1129 = vmul.f32 %v716, %v1096
      %v1131 = vlaneseq
      %v1132 = vshrl.u32 %v1131, 7
      %v1133 = vsub.s32 0, %v1132
      %v1134 = vrot.slane %v1091, %v1133
      %v1136 = vadd.f32 %v1098, %v1134
      %v1137 = vadd.f32 %v1099, %v1134
      %v1138 = vadd.f32 %v1100, %v1134
      %v1139 = vadd.f32 %v1101, %v1134
      %v1140 = vadd.f32 %v1102, %v1134
      %v1141 = vadd.f32 %v1103, %v1134
      %v1142 = vadd.f32 %v1104, %v1134
      %v1143 = vadd.f32 %v1105, %v1134
      %v1144 = vadd.f32 %v1106, %v1134
      %v1145 = vadd.f32 %v1107, %v1134
      %v1146 = vadd.f32 %v1108, %v1134
      %v1147 = vadd.f32 %v1109, %v1134
      %v1148 = vadd.f32 %v1110, %v1134
      %v1149 = vadd.f32 %v1111, %v1134
      %v1150 = vadd.f32 %v1112, %v1134
      %v1151 = vadd.f32 %v1113, %v1134
      %v1152 = vadd.f32 %v1114, %v1134
      %v1153 = vadd.f32 %v1115, %v1134
      %v1154 = vadd.f32 %v1116, %v1134
      %v1155 = vadd.f32 %v1117, %v1134
      %v1156 = vadd.f32 %v1118, %v1134
      %v1157 = vadd.f32 %v1119, %v1134
      %v1158 = vadd.f32 %v1120, %v1134
      %v1159 = vadd.f32 %v1121, %v1134
      %v1160 = vadd.f32 %v1122, %v1134
      %v1161 = vadd.f32 %v1123, %v1134
      %v1162 = vadd.f32 %v1124, %v1134
      %v1163 = vadd.f32 %v1125, %v1134
      %v1164 = vadd.f32 %v1126, %v1134
      %v1165 = vadd.f32 %v1127, %v1134
      %v1166 = vadd.f32 %v1128, %v1134
      %v1167 = vadd.f32 %v1129, %v1134
      %v1168 = vmax.f32 %v1136, 0.0
      %v1169 = vmax.f32 %v1137, 0.0
      %v1170 = vmax.f32 %v1138, 0.0
      %v1171 = vmax.f32 %v1139, 0.0
      %v1172 = vmax.f32 %v1140, 0.0
      %v1173 = vmax.f32 %v1141, 0.0
      %v1174 = vmax.f32 %v1142, 0.0
      %v1175 = vmax.f32 %v1143, 0.0
      %v1176 = vmax.f32 %v1144, 0.0
      %v1177 = vmax.f32 %v1145, 0.0
      %v1178 = vmax.f32 %v1146, 0.0
      %v1179 = vmax.f32 %v1147, 0.0
      %v1180 = vmax.f32 %v1148, 0.0
      %v1181 = vmax.f32 %v1149, 0.0
      %v1182 = vmax.f32 %v1150, 0.0
      %v1183 = vmax.f32 %v1151, 0.0
      %v1184 = vmax.f32 %v1152, 0.0
      %v1185 = vmax.f32 %v1153, 0.0
      %v1186 = vmax.f32 %v1154, 0.0
      %v1187 = vmax.f32 %v1155, 0.0
      %v1188 = vmax.f32 %v1156, 0.0
      %v1189 = vmax.f32 %v1157, 0.0
      %v1190 = vmax.f32 %v1158, 0.0
      %v1191 = vmax.f32 %v1159, 0.0
      %v1192 = vmax.f32 %v1160, 0.0
      %v1193 = vmax.f32 %v1161, 0.0
      %v1194 = vmax.f32 %v1162, 0.0
      %v1195 = vmax.f32 %v1163, 0.0
      %v1196 = vmax.f32 %v1164, 0.0
      %v1197 = vmax.f32 %v1165, 0.0
      %v1198 = vmax.f32 %v1166, 0.0
      %v1199 = vmax.f32 %v1167, 0.0
      %v1200 = vpack.c.bf16 %v1169, %v1168
      %v1201 = vpack.c.bf16 %v1171, %v1170
      %v1202 = vpack.c.bf16 %v1173, %v1172
      %v1203 = vpack.c.bf16 %v1175, %v1174
      %v1204 = vpack.c.bf16 %v1177, %v1176
      %v1205 = vpack.c.bf16 %v1179, %v1178
      %v1206 = vpack.c.bf16 %v1181, %v1180
      %v1207 = vpack.c.bf16 %v1183, %v1182
      %v1208 = vpack.c.bf16 %v1185, %v1184
      %v1209 = vpack.c.bf16 %v1187, %v1186
      %v1210 = vpack.c.bf16 %v1189, %v1188
      %v1211 = vpack.c.bf16 %v1191, %v1190
      %v1212 = vpack.c.bf16 %v1193, %v1192
      %v1213 = vpack.c.bf16 %v1195, %v1194
      %v1214 = vpack.c.bf16 %v1197, %v1196
      %v1215 = vpack.c.bf16 %v1199, %v1198
      %v1232 = vunpack.c.l.b16 %v1200
      %v1233 = vunpack.c.h.b16 %v1200
      %v1234 = vunpack.c.l.b16 %v1201
      %v1235 = vunpack.c.h.b16 %v1201
      %v1236 = vunpack.c.l.b16 %v1202
      %v1237 = vunpack.c.h.b16 %v1202
      %v1238 = vunpack.c.l.b16 %v1203
      %v1239 = vunpack.c.h.b16 %v1203
      %v1240 = vunpack.c.l.b16 %v1204
      %v1241 = vunpack.c.h.b16 %v1204
      %v1242 = vunpack.c.l.b16 %v1205
      %v1243 = vunpack.c.h.b16 %v1205
      %v1244 = vunpack.c.l.b16 %v1206
      %v1245 = vunpack.c.h.b16 %v1206
      %v1246 = vunpack.c.l.b16 %v1207
      %v1247 = vunpack.c.h.b16 %v1207
      %v1248 = vunpack.c.l.b16 %v1208
      %v1249 = vunpack.c.h.b16 %v1208
      %v1250 = vunpack.c.l.b16 %v1209
      %v1251 = vunpack.c.h.b16 %v1209
      %v1252 = vunpack.c.l.b16 %v1210
      %v1253 = vunpack.c.h.b16 %v1210
      %v1254 = vunpack.c.l.b16 %v1211
      %v1255 = vunpack.c.h.b16 %v1211
      %v1256 = vunpack.c.l.b16 %v1212
      %v1257 = vunpack.c.h.b16 %v1212
      %v1258 = vunpack.c.l.b16 %v1213
      %v1259 = vunpack.c.h.b16 %v1213
      %v1260 = vunpack.c.l.b16 %v1214
      %v1261 = vunpack.c.h.b16 %v1214
      %v1262 = vunpack.c.l.b16 %v1215
      %v1263 = vunpack.c.h.b16 %v1215
      %v1264 = vpack.c.b16 %v1232, %v1232
      %v1265 = vpack.c.b16 %v1233, %v1233
      %v1266 = vpack.c.b16 %v1234, %v1234
      %v1267 = vpack.c.b16 %v1235, %v1235
      %v1268 = vpack.c.b16 %v1236, %v1236
      %v1269 = vpack.c.b16 %v1237, %v1237
      %v1270 = vpack.c.b16 %v1238, %v1238
      %v1271 = vpack.c.b16 %v1239, %v1239
      %v1272 = vpack.c.b16 %v1240, %v1240
      %v1273 = vpack.c.b16 %v1241, %v1241
      %v1274 = vpack.c.b16 %v1242, %v1242
      %v1275 = vpack.c.b16 %v1243, %v1243
      %v1276 = vpack.c.b16 %v1244, %v1244
      %v1277 = vpack.c.b16 %v1245, %v1245
      %v1278 = vpack.c.b16 %v1246, %v1246
      %v1279 = vpack.c.b16 %v1247, %v1247
      %v1280 = vpack.c.b16 %v1248, %v1248
      %v1281 = vpack.c.b16 %v1249, %v1249
      %v1282 = vpack.c.b16 %v1250, %v1250
      %v1283 = vpack.c.b16 %v1251, %v1251
      %v1284 = vpack.c.b16 %v1252, %v1252
      %v1285 = vpack.c.b16 %v1253, %v1253
      %v1286 = vpack.c.b16 %v1254, %v1254
      %v1287 = vpack.c.b16 %v1255, %v1255
      %v1288 = vpack.c.b16 %v1256, %v1256
      %v1289 = vpack.c.b16 %v1257, %v1257
      %v1290 = vpack.c.b16 %v1258, %v1258
      %v1291 = vpack.c.b16 %v1259, %v1259
      %v1292 = vpack.c.b16 %v1260, %v1260
      %v1293 = vpack.c.b16 %v1261, %v1261
      %v1294 = vpack.c.b16 %v1262, %v1262
      %v1295 = vpack.c.b16 %v1263, %v1263
      %vm1328 = vcmask 519168
      %1329 = vst.msk [vmem:[%s251] sm:$0xf] %vm1328, %v1264
      %1330 = vst.msk [vmem:[%s251 + $0x4] sm:$0xf] %vm1328, %v1265
      %1331 = vst.msk [vmem:[%s251 + $0x8] sm:$0xf] %vm1328, %v1266
      %1332 = vst.msk [vmem:[%s251 + $0xc] sm:$0xf] %vm1328, %v1267
      %1333 = vst.msk [vmem:[%s251 + $0x10] sm:$0xf] %vm1328, %v1268
      %1334 = vst.msk [vmem:[%s251 + $0x14] sm:$0xf] %vm1328, %v1269
      %1335 = vst.msk [vmem:[%s251 + $0x18] sm:$0xf] %vm1328, %v1270
      %1336 = vst.msk [vmem:[%s251 + $0x1c] sm:$0xf] %vm1328, %v1271
      %1337 = vst.msk [vmem:[%s251 + $0x20] sm:$0xf] %vm1328, %v1272
      %1338 = vst.msk [vmem:[%s251 + $0x24] sm:$0xf] %vm1328, %v1273
      %1339 = vst.msk [vmem:[%s251 + $0x28] sm:$0xf] %vm1328, %v1274
      %1340 = vst.msk [vmem:[%s251 + $0x2c] sm:$0xf] %vm1328, %v1275
      %1341 = vst.msk [vmem:[%s251 + $0x30] sm:$0xf] %vm1328, %v1276
      %1342 = vst.msk [vmem:[%s251 + $0x34] sm:$0xf] %vm1328, %v1277
      %1343 = vst.msk [vmem:[%s251 + $0x38] sm:$0xf] %vm1328, %v1278
      %1344 = vst.msk [vmem:[%s251 + $0x3c] sm:$0xf] %vm1328, %v1279
      %1345 = vst.msk [vmem:[%s251 + $0x40] sm:$0xf] %vm1328, %v1280
      %1346 = vst.msk [vmem:[%s251 + $0x44] sm:$0xf] %vm1328, %v1281
      %1347 = vst.msk [vmem:[%s251 + $0x48] sm:$0xf] %vm1328, %v1282
      %1348 = vst.msk [vmem:[%s251 + $0x4c] sm:$0xf] %vm1328, %v1283
      %1349 = vst.msk [vmem:[%s251 + $0x50] sm:$0xf] %vm1328, %v1284
      %1350 = vst.msk [vmem:[%s251 + $0x54] sm:$0xf] %vm1328, %v1285
      %1351 = vst.msk [vmem:[%s251 + $0x58] sm:$0xf] %vm1328, %v1286
      %1352 = vst.msk [vmem:[%s251 + $0x5c] sm:$0xf] %vm1328, %v1287
      %1353 = vst.msk [vmem:[%s251 + $0x60] sm:$0xf] %vm1328, %v1288
      %1354 = vst.msk [vmem:[%s251 + $0x64] sm:$0xf] %vm1328, %v1289
      %1355 = vst.msk [vmem:[%s251 + $0x68] sm:$0xf] %vm1328, %v1290
      %1356 = vst.msk [vmem:[%s251 + $0x6c] sm:$0xf] %vm1328, %v1291
      %1357 = vst.msk [vmem:[%s251 + $0x70] sm:$0xf] %vm1328, %v1292
      %1358 = vst.msk [vmem:[%s251 + $0x74] sm:$0xf] %vm1328, %v1293
      %1359 = vst.msk [vmem:[%s251 + $0x78] sm:$0xf] %vm1328, %v1294
      %1360 = vst.msk [vmem:[%s251 + $0x7c] sm:$0xf] %vm1328, %v1295
      %p1361 = scmp.lt.s32.totalorder %s17, 1
      %s1362 = scalar_select %p1361, %s17, 1
      %s1363 = smul.addr %s1362, 32
      %s1364 = smul.addr %s1363, 4
      %s1365 = scalar_lea.vmem %s6, %s1364
      // Predicated region
      $region45: #{tpu_custom_call.1} parent=43 // pred_check
        %p1366 = pneg %p166
      $region46: #{tpu_custom_call.1} parent=43 // pred_check_branch
        %1368 = sbr.rel (%p1366) target = $region48
      $region47: #{tpu_custom_call.1} parent=43 // pred_region
        _
      $region48: #{tpu_custom_call.1} parent=43 // pred_fallthru
        _
    $region44: #{tpu_custom_call.1} parent=5 // pred_fallthru
      _
    %p1369 = scmp.le.s32.totalorder 2, %s12
    // Predicated region
    $region49: #{tpu_custom_call.1} parent=5 // pred_check
      %p1370 = pneg %p1369
    $region50: #{tpu_custom_call.1} parent=5 // pred_check_branch
      %1372 = sbr.rel (%p1370) target = $region52
    $region51: #{tpu_custom_call.1} parent=5 // pred_region
      %s1373 = ssub.s32 %s12, 2
      // Predicated region
      $region53: #{tpu_custom_call.1} parent=51 // pred_check
        %p1374 = pneg %p172
      $region54: #{tpu_custom_call.1} parent=51 // pred_check_branch
        %1376 = sbr.rel (%p1374) target = $region56
      $region55: #{tpu_custom_call.1} parent=51 // pred_region
        %p1377 = scmp.lt.s32.totalorder %s18, 1
        %s1378 = scalar_select %p1377, %s18, 1
        %s1379 = smul.addr %s1378, 32
        %s1380 = smul.addr %s1379, 4
        %s1381 = scalar_lea.vmem %s6, %s1380
      $region56: #{tpu_custom_call.1} parent=51 // pred_fallthru
        _
    $region52: #{tpu_custom_call.1} parent=5 // pred_fallthru
      _
  $region6: #{tpu_custom_call.1} parent=0 // loop_footer
    %s16 = sadd.s32 1, %s12
  $region7: #{tpu_custom_call.1} parent=0 // loop_footer_branch
    %11 = sbr.rel target = $region3
  $region8: #{tpu_custom_call.1} parent=0 // loop_exit
    _

</llo_original>
